<compile_context>
chip_gen: v5e
topology: v5e:2x2
jax: 0.10.0
libtpu: 0.0.40
codegen_flags: <defaults>
</compile_context>

<pallas_src>
import math

import jax
import jax.numpy as jnp
from jax.experimental import pallas as pl
from jax.experimental.pallas import tpu as pltpu


def _fused_bilstm_kernel(gp_ref, whh_ref, out_ref, h_ref, c_ref):
    """Recurrence for S fused LSTM streams over one T-chunk.

    gp_ref:  (Tc, B, 4*S*H) f32  precomputed x @ W_ih + (b_ih + b_hh), columns
                                 gate-major: col = g*(S*H) + s*H + k.
    whh_ref: (S*H, 4*S*H)   f32  block-diagonal hidden->gates weights.
    out_ref: (Tc, B, S*H)   f32  per-timestep hidden states, col = s*H + k
                                 (reverse streams still time-flipped; wrapper
                                 un-flips).
    h_ref, c_ref: (B, S*H)  f32  VMEM scratch carrying state across chunks.
    """
    Tc, B, G4 = gp_ref.shape
    SH = G4 // 4

    @pl.when(pl.program_id(0) == 0)
    def _():
        h_ref[...] = jnp.zeros_like(h_ref)
        c_ref[...] = jnp.zeros_like(c_ref)

    whh = whh_ref[...]  # (S*H, 4*S*H) — hoisted out of the loop

    # Per-lane constants for the fused nonlinearity:
    #   sigmoid(x) = 0.5*tanh(0.5*x) + 0.5   (i, f, o gate lanes)
    #   tanh(x)    = 1.0*tanh(1.0*x) + 0.0   (g gate lanes)
    lane = jax.lax.broadcasted_iota(jnp.int32, (1, G4), 1)
    is_g = (lane >= 2 * SH) & (lane < 3 * SH)
    scale = jnp.broadcast_to(
        jnp.where(is_g, 1.0, 0.5).astype(jnp.float32), (B, G4))
    offset = jnp.broadcast_to(
        jnp.where(is_g, 0.0, 0.5).astype(jnp.float32), (B, G4))

    def step(t, carry):
        h, c = carry  # (B, S*H) f32 each, live in vregs
        # Only the recurrent projection sits on the serial chain:
        # one (B, S*H) @ (S*H, 4*S*H) MXU push per step.
        gates = gp_ref[t] + jnp.dot(h, whh,
                                    preferred_element_type=jnp.float32)
        act = scale * jnp.tanh(scale * gates) + offset  # one full-width tanh
        i_g = act[:, 0 * SH:1 * SH]
        f_g = act[:, 1 * SH:2 * SH]
        g_g = act[:, 2 * SH:3 * SH]
        o_g = act[:, 3 * SH:4 * SH]
        c_new = f_g * c + i_g * g_g
        h_new = o_g * jnp.tanh(c_new)
        out_ref[t] = h_new.astype(out_ref.dtype)
        return h_new, c_new

    unroll = True if Tc <= 16 else 8
    h, c = jax.lax.fori_loop(0, Tc, step, (h_ref[...], c_ref[...]),
                             unroll=unroll)
    h_ref[...] = h
    c_ref[...] = c


def _fused_bilstm(gp, whh_big):
    """gp: (T, B, 4*S*H) f32, whh_big: (S*H, 4*S*H) f32 -> (T, B, S*H) f32."""
    T, B, G4 = gp.shape
    SH = G4 // 4

    # Largest divisor of T not exceeding 64 timesteps per chunk; keeps the
    # double-buffered gp chunk tiny even on v7x's 64 MiB VMEM.
    t_chunk = 1
    for cand in range(min(T, 64), 0, -1):
        if T % cand == 0:
            t_chunk = cand
            break
    n_chunks = T // t_chunk

    flops = 2 * T * B * SH * G4 + 10 * T * B * G4
    transcendentals = T * B * (G4 + SH)
    bytes_accessed = 4 * (gp.size + whh_big.size + T * B * SH)

    return pl.pallas_call(
        _fused_bilstm_kernel,
        out_shape=jax.ShapeDtypeStruct((T, B, SH), jnp.float32),
        grid=(n_chunks,),
        in_specs=[
            pl.BlockSpec((t_chunk, B, G4), lambda i: (i, 0, 0)),
            pl.BlockSpec((SH, G4), lambda i: (0, 0)),
        ],
        out_specs=pl.BlockSpec((t_chunk, B, SH), lambda i: (i, 0, 0)),
        scratch_shapes=[
            pltpu.VMEM((B, SH), jnp.float32),  # h carry
            pltpu.VMEM((B, SH), jnp.float32),  # c carry
        ],
        compiler_params=pltpu.CompilerParams(
            dimension_semantics=("arbitrary",)),
        cost_estimate=pl.CostEstimate(
            flops=int(flops),
            transcendentals=int(transcendentals),
            bytes_accessed=int(bytes_accessed)),
    )(gp, whh_big)


def _pack_streams(a_fea, v_fea, pa, pv):
    """Hoisted input projection + lane-dense packing (plain XLA, tiny).

    Stream order is [audio-fwd, audio-rev, video-fwd, video-rev]; reverse
    streams are time-flipped so the kernel runs a single forward recurrence.

    Returns:
      gp      (T, B, 4*S*H)  gate-major columns: col = g*(S*H) + s*H + k
      whh_big (S*H, 4*S*H)   block-diagonal over streams, same column order
    """
    a_t = jnp.transpose(a_fea, (1, 0, 2)).astype(jnp.float32)  # (T, B, Da)
    v_t = jnp.transpose(v_fea, (1, 0, 2)).astype(jnp.float32)  # (T, B, Dv)

    def proj(x_t, w_ih, b):  # (T,B,D) @ (D,4H) + (1,4H) -> (T,B,4H)
        return jnp.einsum("tbd,dg->tbg", x_t, w_ih) + b

    gps = [
        proj(a_t, pa["w_ih_f"], pa["b_f"]),
        proj(jnp.flip(a_t, axis=0), pa["w_ih_r"], pa["b_r"]),
        proj(v_t, pv["w_ih_f"], pv["b_f"]),
        proj(jnp.flip(v_t, axis=0), pv["w_ih_r"], pv["b_r"]),
    ]
    T, B, G = gps[0].shape
    H = G // 4
    S = 4

    gp = jnp.stack(gps, axis=1)                 # (T, S, B, 4H)
    gp = gp.reshape(T, S, B, 4, H)              # split gate axis
    gp = jnp.transpose(gp, (0, 2, 3, 1, 4))     # (T, B, 4, S, H)
    gp = gp.reshape(T, B, 4 * S * H)            # gate-major columns

    whh = jnp.stack([pa["w_hh_f"], pa["w_hh_r"],
                     pv["w_hh_f"], pv["w_hh_r"]], axis=0).astype(jnp.float32)
    whh = whh.reshape(S, H, 4, H)               # (S, H, gate, H')
    eye = jnp.eye(S, dtype=jnp.float32)
    # big[s, h, g, s', h'] = whh[s, h, g, h'] * [s == s']  (block diagonal)
    big = jnp.einsum("shgk,st->shgtk", whh, eye)
    whh_big = big.reshape(S * H, 4 * S * H)
    return gp, whh_big, H


@jax.jit
def lstm_a_v_forward(a_fea, v_fea, params_audio, params_video):
    """Equivalent of LSTM_A_V.forward: returns (lstm_audio, lstm_video)."""
    gp, whh_big, H = _pack_streams(a_fea, v_fea, params_audio, params_video)
    out = _fused_bilstm(gp, whh_big)             # (T, B, S*H)
    T, B, _ = out.shape
    out = out.reshape(T, B, 4, H)                # col = s*H + k  ->  (S, H)

    a_fwd = out[:, :, 0]                         # (T, B, H)
    a_rev = jnp.flip(out[:, :, 1], axis=0)       # un-flip reverse direction
    v_fwd = out[:, :, 2]
    v_rev = jnp.flip(out[:, :, 3], axis=0)

    lstm_audio = jnp.transpose(jnp.concatenate([a_fwd, a_rev], -1), (1, 0, 2))
    lstm_video = jnp.transpose(jnp.concatenate([v_fwd, v_rev], -1), (1, 0, 2))
    return lstm_audio, lstm_video


def init_bilstm_params(key, input_dim, hidden_dim):
    """Deterministic PyTorch-style init: U(-1/sqrt(H), 1/sqrt(H))."""
    k = 1.0 / math.sqrt(hidden_dim)
    keys = jax.random.split(key, 8)

    def u(kk, shape):
        return jax.random.uniform(kk, shape, jnp.float32, minval=-k, maxval=k)

    return {
        # stored pre-transposed: (D, 4H) / (H, 4H); gate order i,f,g,o
        "w_ih_f": u(keys[0], (input_dim, 4 * hidden_dim)),
        "w_hh_f": u(keys[1], (hidden_dim, 4 * hidden_dim)),
        "b_f": u(keys[2], (1, 4 * hidden_dim)) + u(keys[3], (1, 4 * hidden_dim)),
        "w_ih_r": u(keys[4], (input_dim, 4 * hidden_dim)),
        "w_hh_r": u(keys[5], (hidden_dim, 4 * hidden_dim)),
        "b_r": u(keys[6], (1, 4 * hidden_dim)) + u(keys[7], (1, 4 * hidden_dim)),
    }


# ----------------------------- pure-JAX reference -----------------------------

def _ref_lstm_direction(x_t, w_ih, w_hh, b, reverse):
    T, B, _ = x_t.shape
    H = w_hh.shape[0]
    h = jnp.zeros((B, H), jnp.float32)
    c = jnp.zeros((B, H), jnp.float32)
    outs = [None] * T
    order = range(T - 1, -1, -1) if reverse else range(T)
    for t in order:
        gates = x_t[t] @ w_ih + h @ w_hh + b
        i = jax.nn.sigmoid(gates[:, 0:H])
        f = jax.nn.sigmoid(gates[:, H:2 * H])
        g = jnp.tanh(gates[:, 2 * H:3 * H])
        o = jax.nn.sigmoid(gates[:, 3 * H:4 * H])
        c = f * c + i * g
        h = o * jnp.tanh(c)
        outs[t] = h
    return jnp.stack(outs, axis=0)  # (T, B, H)


def _ref_bilstm(x_btd, p):
    x_t = jnp.transpose(x_btd, (1, 0, 2)).astype(jnp.float32)
    f = _ref_lstm_direction(x_t, p["w_ih_f"], p["w_hh_f"], p["b_f"], False)
    r = _ref_lstm_direction(x_t, p["w_ih_r"], p["w_hh_r"], p["b_r"], True)
    return jnp.transpose(jnp.concatenate([f, r], -1), (1, 0, 2))


if __name__ == "__main__":
    key = jax.random.PRNGKey(0)
    k_a, k_v, k_pa, k_pv = jax.random.split(key, 4)

    B, T = 2, 8               # batch, seg_num
    a_dim = v_dim = 32        # must equal hidden_dim (see init_hidden note)
    hidden_dim = 32           # S*H = 4*32 = 128 lanes -> fully lane-dense

    a_fea = jax.random.normal(k_a, (B, T, a_dim), jnp.float32)
    v_fea = jax.random.normal(k_v, (B, T, v_dim), jnp.float32)

    params_audio = init_bilstm_params(k_pa, a_dim, hidden_dim)
    params_video = init_bilstm_params(k_pv, v_dim, hidden_dim)

    lstm_audio, lstm_video = lstm_a_v_forward(
        a_fea, v_fea, params_audio, params_video)
    jax.block_until_ready((lstm_audio, lstm_video))

    assert lstm_audio.shape == (B, T, 2 * hidden_dim)
    assert lstm_video.shape == (B, T, 2 * hidden_dim)
    assert lstm_audio.dtype == jnp.float32 and lstm_video.dtype == jnp.float32

    # numerical sanity check vs a pure-JAX bi-LSTM reference
    ref_audio = _ref_bilstm(a_fea, params_audio)
    ref_video = _ref_bilstm(v_fea, params_video)
    max_err = max(float(jnp.max(jnp.abs(lstm_audio - ref_audio))),
                  float(jnp.max(jnp.abs(lstm_video - ref_video))))
    assert max_err < 2e-2, f"numerical mismatch: max abs err {max_err}"

    print("KERNEL_OK")
</pallas_src>

<mosaic_0001>
module attributes {stable_mosaic.version = 11 : i64} {
  func.func @_fused_bilstm_kernel(%arg0: i32, %arg1: memref<8x2x512xf32, #tpu.memory_space<vmem>>, %arg2: memref<128x512xf32, #tpu.memory_space<vmem>>, %arg3: memref<8x2x128xf32, #tpu.memory_space<vmem>>, %arg4: memref<2x128xf32, #tpu.memory_space<vmem>>, %arg5: memref<2x128xf32, #tpu.memory_space<vmem>>) attributes {dimension_semantics = [#tpu.dimension_semantics<arbitrary>], iteration_bounds = array<i64: 1>, scalar_prefetch = 0 : i64, scratch_operands = 2 : i64, tpu.core_type = #tpu.core_type<tc>, window_params = [{transform_indices = @transform_0, window_bounds = array<i64: 8, 2, 512>}, {pipeline_mode = #tpu.pipeline_mode<synchronous>, transform_indices = @transform_1, window_bounds = array<i64: 128, 512>}, {transform_indices = @transform_2, window_bounds = array<i64: 8, 2, 128>}]} {
    %c0_i32 = arith.constant 0 : i32
    %0 = arith.cmpi eq, %arg0, %c0_i32 : i32
    %1 = arith.extui %0 : i1 to i32
    %c0_i32_0 = arith.constant 0 : i32
    %2 = arith.cmpi ne, %1, %c0_i32_0 : i32
    scf.if %2 {
      %cst_54 = arith.constant 0.000000e+00 : f32
      %200 = vector.broadcast %cst_54 : f32 to vector<2x128xf32>
      %c0_55 = arith.constant 0 : index
      %c0_56 = arith.constant 0 : index
      %201 = vector.load %arg4[%c0_55, %c0_56] : memref<2x128xf32, #tpu.memory_space<vmem>>, vector<2x128xf32>
      tpu.vector_store %arg4[%c0_55, %c0_56], %200 {strides = array<i32>} : memref<2x128xf32, #tpu.memory_space<vmem>>, vector<2x128xf32>,
      %cst_57 = arith.constant 0.000000e+00 : f32
      %202 = vector.broadcast %cst_57 : f32 to vector<2x128xf32>
      %c0_58 = arith.constant 0 : index
      %c0_59 = arith.constant 0 : index
      %203 = vector.load %arg5[%c0_58, %c0_59] : memref<2x128xf32, #tpu.memory_space<vmem>>, vector<2x128xf32>
      tpu.vector_store %arg5[%c0_58, %c0_59], %202 {strides = array<i32>} : memref<2x128xf32, #tpu.memory_space<vmem>>, vector<2x128xf32>,
    } else {
    }
    %c0 = arith.constant 0 : index
    %c0_1 = arith.constant 0 : index
    %3 = vector.load %arg2[%c0, %c0_1] : memref<128x512xf32, #tpu.memory_space<vmem>>, vector<128x512xf32>
    %4 = tpu.iota {dimensions = array<i32: 1>} : vector<1x512xi32>
    %c256_i32 = arith.constant 256 : i32
    %5 = vector.broadcast %c256_i32 : i32 to vector<1x512xi32>
    %6 = arith.cmpi sge, %4, %5 : vector<1x512xi32>
    %c384_i32 = arith.constant 384 : i32
    %7 = vector.broadcast %c384_i32 : i32 to vector<1x512xi32>
    %8 = arith.cmpi slt, %4, %7 : vector<1x512xi32>
    %9 = arith.andi %6, %8 : vector<1x512xi1>
    %cst = arith.constant 1.000000e+00 : f32
    %cst_2 = arith.constant 5.000000e-01 : f32
    %10 = vector.broadcast %cst : f32 to vector<1x512xf32>
    %11 = vector.broadcast %cst_2 : f32 to vector<1x512xf32>
    %12 = arith.select %9, %10, %11 : vector<1x512xi1>, vector<1x512xf32>
    %13 = vector.shape_cast %12 : vector<1x512xf32> to vector<1x512xf32>
    %14 = vector.broadcast %13 : vector<1x512xf32> to vector<2x512xf32>
    %cst_3 = arith.constant 0.000000e+00 : f32
    %cst_4 = arith.constant 5.000000e-01 : f32
    %15 = vector.broadcast %cst_3 : f32 to vector<1x512xf32>
    %16 = vector.broadcast %cst_4 : f32 to vector<1x512xf32>
    %17 = arith.select %9, %15, %16 : vector<1x512xi1>, vector<1x512xf32>
    %18 = vector.shape_cast %17 : vector<1x512xf32> to vector<1x512xf32>
    %19 = vector.broadcast %18 : vector<1x512xf32> to vector<2x512xf32>
    %c0_5 = arith.constant 0 : index
    %c0_6 = arith.constant 0 : index
    %20 = vector.load %arg4[%c0_5, %c0_6] : memref<2x128xf32, #tpu.memory_space<vmem>>, vector<2x128xf32>
    %c0_7 = arith.constant 0 : index
    %c0_8 = arith.constant 0 : index
    %21 = vector.load %arg5[%c0_7, %c0_8] : memref<2x128xf32, #tpu.memory_space<vmem>>, vector<2x128xf32>
    %c0_i32_9 = arith.constant 0 : i32
    %22 = arith.index_cast %c0_i32_9 : i32 to index
    %c0_10 = arith.constant 0 : index
    %c0_11 = arith.constant 0 : index
    %23 = vector.load %arg1[%22, %c0_10, %c0_11] : memref<8x2x512xf32, #tpu.memory_space<vmem>>, vector<1x2x512xf32>
    %24 = vector.shape_cast %23 : vector<1x2x512xf32> to vector<2x512xf32>
    %cst_12 = arith.constant dense<0.000000e+00> : vector<2x512xf32>
    %25 = tpu.matmul %20, %3, %cst_12 {dimension_numbers = #tpu.dot_dimension_numbers<[1], [0], [0], [1], [0, 0, 1, 1], [], []>} : vector<2x128xf32>, vector<128x512xf32>, vector<2x512xf32> -> vector<2x512xf32>
    %26 = arith.addf %24, %25 : vector<2x512xf32>
    %27 = arith.mulf %14, %26 : vector<2x512xf32>
    %28 = math.tanh %27 : vector<2x512xf32>
    %29 = arith.mulf %14, %28 : vector<2x512xf32>
    %30 = arith.addf %29, %19 : vector<2x512xf32>
    %31 = vector.extract_strided_slice %30 {offsets = [0, 0], sizes = [2, 128], strides = [1, 1]} : vector<2x512xf32> to vector<2x128xf32>
    %32 = vector.extract_strided_slice %30 {offsets = [0, 128], sizes = [2, 128], strides = [1, 1]} : vector<2x512xf32> to vector<2x128xf32>
    %33 = vector.extract_strided_slice %30 {offsets = [0, 256], sizes = [2, 128], strides = [1, 1]} : vector<2x512xf32> to vector<2x128xf32>
    %34 = vector.extract_strided_slice %30 {offsets = [0, 384], sizes = [2, 128], strides = [1, 1]} : vector<2x512xf32> to vector<2x128xf32>
    %35 = arith.mulf %32, %21 : vector<2x128xf32>
    %36 = arith.mulf %31, %33 : vector<2x128xf32>
    %37 = arith.addf %35, %36 : vector<2x128xf32>
    %38 = math.tanh %37 : vector<2x128xf32>
    %39 = arith.mulf %34, %38 : vector<2x128xf32>
    %40 = arith.index_cast %c0_i32_9 : i32 to index
    %c0_13 = arith.constant 0 : index
    %c0_14 = arith.constant 0 : index
    %41 = vector.load %arg3[%40, %c0_13, %c0_14] : memref<8x2x128xf32, #tpu.memory_space<vmem>>, vector<1x2x128xf32>
    %42 = vector.shape_cast %41 : vector<1x2x128xf32> to vector<2x128xf32>
    %43 = vector.shape_cast %39 : vector<2x128xf32> to vector<1x2x128xf32>
    tpu.vector_store %arg3[%40, %c0_13, %c0_14], %43 {strides = array<i32>} : memref<8x2x128xf32, #tpu.memory_space<vmem>>, vector<1x2x128xf32>,
    %c1_i32 = arith.constant 1 : i32
    %44 = arith.index_cast %c1_i32 : i32 to index
    %c0_15 = arith.constant 0 : index
    %c0_16 = arith.constant 0 : index
    %45 = vector.load %arg1[%44, %c0_15, %c0_16] : memref<8x2x512xf32, #tpu.memory_space<vmem>>, vector<1x2x512xf32>
    %46 = vector.shape_cast %45 : vector<1x2x512xf32> to vector<2x512xf32>
    %cst_17 = arith.constant dense<0.000000e+00> : vector<2x512xf32>
    %47 = tpu.matmul %39, %3, %cst_17 {dimension_numbers = #tpu.dot_dimension_numbers<[1], [0], [0], [1], [0, 0, 1, 1], [], []>} : vector<2x128xf32>, vector<128x512xf32>, vector<2x512xf32> -> vector<2x512xf32>
    %48 = arith.addf %46, %47 : vector<2x512xf32>
    %49 = arith.mulf %14, %48 : vector<2x512xf32>
    %50 = math.tanh %49 : vector<2x512xf32>
    %51 = arith.mulf %14, %50 : vector<2x512xf32>
    %52 = arith.addf %51, %19 : vector<2x512xf32>
    %53 = vector.extract_strided_slice %52 {offsets = [0, 0], sizes = [2, 128], strides = [1, 1]} : vector<2x512xf32> to vector<2x128xf32>
    %54 = vector.extract_strided_slice %52 {offsets = [0, 128], sizes = [2, 128], strides = [1, 1]} : vector<2x512xf32> to vector<2x128xf32>
    %55 = vector.extract_strided_slice %52 {offsets = [0, 256], sizes = [2, 128], strides = [1, 1]} : vector<2x512xf32> to vector<2x128xf32>
    %56 = vector.extract_strided_slice %52 {offsets = [0, 384], sizes = [2, 128], strides = [1, 1]} : vector<2x512xf32> to vector<2x128xf32>
    %57 = arith.mulf %54, %37 : vector<2x128xf32>
    %58 = arith.mulf %53, %55 : vector<2x128xf32>
    %59 = arith.addf %57, %58 : vector<2x128xf32>
    %60 = math.tanh %59 : vector<2x128xf32>
    %61 = arith.mulf %56, %60 : vector<2x128xf32>
    %62 = arith.index_cast %c1_i32 : i32 to index
    %c0_18 = arith.constant 0 : index
    %c0_19 = arith.constant 0 : index
    %63 = vector.load %arg3[%62, %c0_18, %c0_19] : memref<8x2x128xf32, #tpu.memory_space<vmem>>, vector<1x2x128xf32>
    %64 = vector.shape_cast %63 : vector<1x2x128xf32> to vector<2x128xf32>
    %65 = vector.shape_cast %61 : vector<2x128xf32> to vector<1x2x128xf32>
    tpu.vector_store %arg3[%62, %c0_18, %c0_19], %65 {strides = array<i32>} : memref<8x2x128xf32, #tpu.memory_space<vmem>>, vector<1x2x128xf32>,
    %c2_i32 = arith.constant 2 : i32
    %66 = arith.index_cast %c2_i32 : i32 to index
    %c0_20 = arith.constant 0 : index
    %c0_21 = arith.constant 0 : index
    %67 = vector.load %arg1[%66, %c0_20, %c0_21] : memref<8x2x512xf32, #tpu.memory_space<vmem>>, vector<1x2x512xf32>
    %68 = vector.shape_cast %67 : vector<1x2x512xf32> to vector<2x512xf32>
    %cst_22 = arith.constant dense<0.000000e+00> : vector<2x512xf32>
    %69 = tpu.matmul %61, %3, %cst_22 {dimension_numbers = #tpu.dot_dimension_numbers<[1], [0], [0], [1], [0, 0, 1, 1], [], []>} : vector<2x128xf32>, vector<128x512xf32>, vector<2x512xf32> -> vector<2x512xf32>
    %70 = arith.addf %68, %69 : vector<2x512xf32>
    %71 = arith.mulf %14, %70 : vector<2x512xf32>
    %72 = math.tanh %71 : vector<2x512xf32>
    %73 = arith.mulf %14, %72 : vector<2x512xf32>
    %74 = arith.addf %73, %19 : vector<2x512xf32>
    %75 = vector.extract_strided_slice %74 {offsets = [0, 0], sizes = [2, 128], strides = [1, 1]} : vector<2x512xf32> to vector<2x128xf32>
    %76 = vector.extract_strided_slice %74 {offsets = [0, 128], sizes = [2, 128], strides = [1, 1]} : vector<2x512xf32> to vector<2x128xf32>
    %77 = vector.extract_strided_slice %74 {offsets = [0, 256], sizes = [2, 128], strides = [1, 1]} : vector<2x512xf32> to vector<2x128xf32>
    %78 = vector.extract_strided_slice %74 {offsets = [0, 384], sizes = [2, 128], strides = [1, 1]} : vector<2x512xf32> to vector<2x128xf32>
    %79 = arith.mulf %76, %59 : vector<2x128xf32>
    %80 = arith.mulf %75, %77 : vector<2x128xf32>
    %81 = arith.addf %79, %80 : vector<2x128xf32>
    %82 = math.tanh %81 : vector<2x128xf32>
    %83 = arith.mulf %78, %82 : vector<2x128xf32>
    %84 = arith.index_cast %c2_i32 : i32 to index
    %c0_23 = arith.constant 0 : index
    %c0_24 = arith.constant 0 : index
    %85 = vector.load %arg3[%84, %c0_23, %c0_24] : memref<8x2x128xf32, #tpu.memory_space<vmem>>, vector<1x2x128xf32>
    %86 = vector.shape_cast %85 : vector<1x2x128xf32> to vector<2x128xf32>
    %87 = vector.shape_cast %83 : vector<2x128xf32> to vector<1x2x128xf32>
    tpu.vector_store %arg3[%84, %c0_23, %c0_24], %87 {strides = array<i32>} : memref<8x2x128xf32, #tpu.memory_space<vmem>>, vector<1x2x128xf32>,
    %c3_i32 = arith.constant 3 : i32
    %88 = arith.index_cast %c3_i32 : i32 to index
    %c0_25 = arith.constant 0 : index
    %c0_26 = arith.constant 0 : index
    %89 = vector.load %arg1[%88, %c0_25, %c0_26] : memref<8x2x512xf32, #tpu.memory_space<vmem>>, vector<1x2x512xf32>
    %90 = vector.shape_cast %89 : vector<1x2x512xf32> to vector<2x512xf32>
    %cst_27 = arith.constant dense<0.000000e+00> : vector<2x512xf32>
    %91 = tpu.matmul %83, %3, %cst_27 {dimension_numbers = #tpu.dot_dimension_numbers<[1], [0], [0], [1], [0, 0, 1, 1], [], []>} : vector<2x128xf32>, vector<128x512xf32>, vector<2x512xf32> -> vector<2x512xf32>
    %92 = arith.addf %90, %91 : vector<2x512xf32>
    %93 = arith.mulf %14, %92 : vector<2x512xf32>
    %94 = math.tanh %93 : vector<2x512xf32>
    %95 = arith.mulf %14, %94 : vector<2x512xf32>
    %96 = arith.addf %95, %19 : vector<2x512xf32>
    %97 = vector.extract_strided_slice %96 {offsets = [0, 0], sizes = [2, 128], strides = [1, 1]} : vector<2x512xf32> to vector<2x128xf32>
    %98 = vector.extract_strided_slice %96 {offsets = [0, 128], sizes = [2, 128], strides = [1, 1]} : vector<2x512xf32> to vector<2x128xf32>
    %99 = vector.extract_strided_slice %96 {offsets = [0, 256], sizes = [2, 128], strides = [1, 1]} : vector<2x512xf32> to vector<2x128xf32>
    %100 = vector.extract_strided_slice %96 {offsets = [0, 384], sizes = [2, 128], strides = [1, 1]} : vector<2x512xf32> to vector<2x128xf32>
    %101 = arith.mulf %98, %81 : vector<2x128xf32>
    %102 = arith.mulf %97, %99 : vector<2x128xf32>
    %103 = arith.addf %101, %102 : vector<2x128xf32>
    %104 = math.tanh %103 : vector<2x128xf32>
    %105 = arith.mulf %100, %104 : vector<2x128xf32>
    %106 = arith.index_cast %c3_i32 : i32 to index
    %c0_28 = arith.constant 0 : index
    %c0_29 = arith.constant 0 : index
    %107 = vector.load %arg3[%106, %c0_28, %c0_29] : memref<8x2x128xf32, #tpu.memory_space<vmem>>, vector<1x2x128xf32>
    %108 = vector.shape_cast %107 : vector<1x2x128xf32> to vector<2x128xf32>
    %109 = vector.shape_cast %105 : vector<2x128xf32> to vector<1x2x128xf32>
    tpu.vector_store %arg3[%106, %c0_28, %c0_29], %109 {strides = array<i32>} : memref<8x2x128xf32, #tpu.memory_space<vmem>>, vector<1x2x128xf32>,
    %c4_i32 = arith.constant 4 : i32
    %110 = arith.index_cast %c4_i32 : i32 to index
    %c0_30 = arith.constant 0 : index
    %c0_31 = arith.constant 0 : index
    %111 = vector.load %arg1[%110, %c0_30, %c0_31] : memref<8x2x512xf32, #tpu.memory_space<vmem>>, vector<1x2x512xf32>
    %112 = vector.shape_cast %111 : vector<1x2x512xf32> to vector<2x512xf32>
    %cst_32 = arith.constant dense<0.000000e+00> : vector<2x512xf32>
    %113 = tpu.matmul %105, %3, %cst_32 {dimension_numbers = #tpu.dot_dimension_numbers<[1], [0], [0], [1], [0, 0, 1, 1], [], []>} : vector<2x128xf32>, vector<128x512xf32>, vector<2x512xf32> -> vector<2x512xf32>
    %114 = arith.addf %112, %113 : vector<2x512xf32>
    %115 = arith.mulf %14, %114 : vector<2x512xf32>
    %116 = math.tanh %115 : vector<2x512xf32>
    %117 = arith.mulf %14, %116 : vector<2x512xf32>
    %118 = arith.addf %117, %19 : vector<2x512xf32>
    %119 = vector.extract_strided_slice %118 {offsets = [0, 0], sizes = [2, 128], strides = [1, 1]} : vector<2x512xf32> to vector<2x128xf32>
    %120 = vector.extract_strided_slice %118 {offsets = [0, 128], sizes = [2, 128], strides = [1, 1]} : vector<2x512xf32> to vector<2x128xf32>
    %121 = vector.extract_strided_slice %118 {offsets = [0, 256], sizes = [2, 128], strides = [1, 1]} : vector<2x512xf32> to vector<2x128xf32>
    %122 = vector.extract_strided_slice %118 {offsets = [0, 384], sizes = [2, 128], strides = [1, 1]} : vector<2x512xf32> to vector<2x128xf32>
    %123 = arith.mulf %120, %103 : vector<2x128xf32>
    %124 = arith.mulf %119, %121 : vector<2x128xf32>
    %125 = arith.addf %123, %124 : vector<2x128xf32>
    %126 = math.tanh %125 : vector<2x128xf32>
    %127 = arith.mulf %122, %126 : vector<2x128xf32>
    %128 = arith.index_cast %c4_i32 : i32 to index
    %c0_33 = arith.constant 0 : index
    %c0_34 = arith.constant 0 : index
    %129 = vector.load %arg3[%128, %c0_33, %c0_34] : memref<8x2x128xf32, #tpu.memory_space<vmem>>, vector<1x2x128xf32>
    %130 = vector.shape_cast %129 : vector<1x2x128xf32> to vector<2x128xf32>
    %131 = vector.shape_cast %127 : vector<2x128xf32> to vector<1x2x128xf32>
    tpu.vector_store %arg3[%128, %c0_33, %c0_34], %131 {strides = array<i32>} : memref<8x2x128xf32, #tpu.memory_space<vmem>>, vector<1x2x128xf32>,
    %c5_i32 = arith.constant 5 : i32
    %132 = arith.index_cast %c5_i32 : i32 to index
    %c0_35 = arith.constant 0 : index
    %c0_36 = arith.constant 0 : index
    %133 = vector.load %arg1[%132, %c0_35, %c0_36] : memref<8x2x512xf32, #tpu.memory_space<vmem>>, vector<1x2x512xf32>
    %134 = vector.shape_cast %133 : vector<1x2x512xf32> to vector<2x512xf32>
    %cst_37 = arith.constant dense<0.000000e+00> : vector<2x512xf32>
    %135 = tpu.matmul %127, %3, %cst_37 {dimension_numbers = #tpu.dot_dimension_numbers<[1], [0], [0], [1], [0, 0, 1, 1], [], []>} : vector<2x128xf32>, vector<128x512xf32>, vector<2x512xf32> -> vector<2x512xf32>
    %136 = arith.addf %134, %135 : vector<2x512xf32>
    %137 = arith.mulf %14, %136 : vector<2x512xf32>
    %138 = math.tanh %137 : vector<2x512xf32>
    %139 = arith.mulf %14, %138 : vector<2x512xf32>
    %140 = arith.addf %139, %19 : vector<2x512xf32>
    %141 = vector.extract_strided_slice %140 {offsets = [0, 0], sizes = [2, 128], strides = [1, 1]} : vector<2x512xf32> to vector<2x128xf32>
    %142 = vector.extract_strided_slice %140 {offsets = [0, 128], sizes = [2, 128], strides = [1, 1]} : vector<2x512xf32> to vector<2x128xf32>
    %143 = vector.extract_strided_slice %140 {offsets = [0, 256], sizes = [2, 128], strides = [1, 1]} : vector<2x512xf32> to vector<2x128xf32>
    %144 = vector.extract_strided_slice %140 {offsets = [0, 384], sizes = [2, 128], strides = [1, 1]} : vector<2x512xf32> to vector<2x128xf32>
    %145 = arith.mulf %142, %125 : vector<2x128xf32>
    %146 = arith.mulf %141, %143 : vector<2x128xf32>
    %147 = arith.addf %145, %146 : vector<2x128xf32>
    %148 = math.tanh %147 : vector<2x128xf32>
    %149 = arith.mulf %144, %148 : vector<2x128xf32>
    %150 = arith.index_cast %c5_i32 : i32 to index
    %c0_38 = arith.constant 0 : index
    %c0_39 = arith.constant 0 : index
    %151 = vector.load %arg3[%150, %c0_38, %c0_39] : memref<8x2x128xf32, #tpu.memory_space<vmem>>, vector<1x2x128xf32>
    %152 = vector.shape_cast %151 : vector<1x2x128xf32> to vector<2x128xf32>
    %153 = vector.shape_cast %149 : vector<2x128xf32> to vector<1x2x128xf32>
    tpu.vector_store %arg3[%150, %c0_38, %c0_39], %153 {strides = array<i32>} : memref<8x2x128xf32, #tpu.memory_space<vmem>>, vector<1x2x128xf32>,
    %c6_i32 = arith.constant 6 : i32
    %154 = arith.index_cast %c6_i32 : i32 to index
    %c0_40 = arith.constant 0 : index
    %c0_41 = arith.constant 0 : index
    %155 = vector.load %arg1[%154, %c0_40, %c0_41] : memref<8x2x512xf32, #tpu.memory_space<vmem>>, vector<1x2x512xf32>
    %156 = vector.shape_cast %155 : vector<1x2x512xf32> to vector<2x512xf32>
    %cst_42 = arith.constant dense<0.000000e+00> : vector<2x512xf32>
    %157 = tpu.matmul %149, %3, %cst_42 {dimension_numbers = #tpu.dot_dimension_numbers<[1], [0], [0], [1], [0, 0, 1, 1], [], []>} : vector<2x128xf32>, vector<128x512xf32>, vector<2x512xf32> -> vector<2x512xf32>
    %158 = arith.addf %156, %157 : vector<2x512xf32>
    %159 = arith.mulf %14, %158 : vector<2x512xf32>
    %160 = math.tanh %159 : vector<2x512xf32>
    %161 = arith.mulf %14, %160 : vector<2x512xf32>
    %162 = arith.addf %161, %19 : vector<2x512xf32>
    %163 = vector.extract_strided_slice %162 {offsets = [0, 0], sizes = [2, 128], strides = [1, 1]} : vector<2x512xf32> to vector<2x128xf32>
    %164 = vector.extract_strided_slice %162 {offsets = [0, 128], sizes = [2, 128], strides = [1, 1]} : vector<2x512xf32> to vector<2x128xf32>
    %165 = vector.extract_strided_slice %162 {offsets = [0, 256], sizes = [2, 128], strides = [1, 1]} : vector<2x512xf32> to vector<2x128xf32>
    %166 = vector.extract_strided_slice %162 {offsets = [0, 384], sizes = [2, 128], strides = [1, 1]} : vector<2x512xf32> to vector<2x128xf32>
    %167 = arith.mulf %164, %147 : vector<2x128xf32>
    %168 = arith.mulf %163, %165 : vector<2x128xf32>
    %169 = arith.addf %167, %168 : vector<2x128xf32>
    %170 = math.tanh %169 : vector<2x128xf32>
    %171 = arith.mulf %166, %170 : vector<2x128xf32>
    %172 = arith.index_cast %c6_i32 : i32 to index
    %c0_43 = arith.constant 0 : index
    %c0_44 = arith.constant 0 : index
    %173 = vector.load %arg3[%172, %c0_43, %c0_44] : memref<8x2x128xf32, #tpu.memory_space<vmem>>, vector<1x2x128xf32>
    %174 = vector.shape_cast %173 : vector<1x2x128xf32> to vector<2x128xf32>
    %175 = vector.shape_cast %171 : vector<2x128xf32> to vector<1x2x128xf32>
    tpu.vector_store %arg3[%172, %c0_43, %c0_44], %175 {strides = array<i32>} : memref<8x2x128xf32, #tpu.memory_space<vmem>>, vector<1x2x128xf32>,
    %c7_i32 = arith.constant 7 : i32
    %176 = arith.index_cast %c7_i32 : i32 to index
    %c0_45 = arith.constant 0 : index
    %c0_46 = arith.constant 0 : index
    %177 = vector.load %arg1[%176, %c0_45, %c0_46] : memref<8x2x512xf32, #tpu.memory_space<vmem>>, vector<1x2x512xf32>
    %178 = vector.shape_cast %177 : vector<1x2x512xf32> to vector<2x512xf32>
    %cst_47 = arith.constant dense<0.000000e+00> : vector<2x512xf32>
    %179 = tpu.matmul %171, %3, %cst_47 {dimension_numbers = #tpu.dot_dimension_numbers<[1], [0], [0], [1], [0, 0, 1, 1], [], []>} : vector<2x128xf32>, vector<128x512xf32>, vector<2x512xf32> -> vector<2x512xf32>
    %180 = arith.addf %178, %179 : vector<2x512xf32>
    %181 = arith.mulf %14, %180 : vector<2x512xf32>
    %182 = math.tanh %181 : vector<2x512xf32>
    %183 = arith.mulf %14, %182 : vector<2x512xf32>
    %184 = arith.addf %183, %19 : vector<2x512xf32>
    %185 = vector.extract_strided_slice %184 {offsets = [0, 0], sizes = [2, 128], strides = [1, 1]} : vector<2x512xf32> to vector<2x128xf32>
    %186 = vector.extract_strided_slice %184 {offsets = [0, 128], sizes = [2, 128], strides = [1, 1]} : vector<2x512xf32> to vector<2x128xf32>
    %187 = vector.extract_strided_slice %184 {offsets = [0, 256], sizes = [2, 128], strides = [1, 1]} : vector<2x512xf32> to vector<2x128xf32>
    %188 = vector.extract_strided_slice %184 {offsets = [0, 384], sizes = [2, 128], strides = [1, 1]} : vector<2x512xf32> to vector<2x128xf32>
    %189 = arith.mulf %186, %169 : vector<2x128xf32>
    %190 = arith.mulf %185, %187 : vector<2x128xf32>
    %191 = arith.addf %189, %190 : vector<2x128xf32>
    %192 = math.tanh %191 : vector<2x128xf32>
    %193 = arith.mulf %188, %192 : vector<2x128xf32>
    %194 = arith.index_cast %c7_i32 : i32 to index
    %c0_48 = arith.constant 0 : index
    %c0_49 = arith.constant 0 : index
    %195 = vector.load %arg3[%194, %c0_48, %c0_49] : memref<8x2x128xf32, #tpu.memory_space<vmem>>, vector<1x2x128xf32>
    %196 = vector.shape_cast %195 : vector<1x2x128xf32> to vector<2x128xf32>
    %197 = vector.shape_cast %193 : vector<2x128xf32> to vector<1x2x128xf32>
    tpu.vector_store %arg3[%194, %c0_48, %c0_49], %197 {strides = array<i32>} : memref<8x2x128xf32, #tpu.memory_space<vmem>>, vector<1x2x128xf32>,
    %c8_i32 = arith.constant 8 : i32
    %c0_50 = arith.constant 0 : index
    %c0_51 = arith.constant 0 : index
    %198 = vector.load %arg4[%c0_50, %c0_51] : memref<2x128xf32, #tpu.memory_space<vmem>>, vector<2x128xf32>
    tpu.vector_store %arg4[%c0_50, %c0_51], %193 {strides = array<i32>} : memref<2x128xf32, #tpu.memory_space<vmem>>, vector<2x128xf32>,
    %c0_52 = arith.constant 0 : index
    %c0_53 = arith.constant 0 : index
    %199 = vector.load %arg5[%c0_52, %c0_53] : memref<2x128xf32, #tpu.memory_space<vmem>>, vector<2x128xf32>
    tpu.vector_store %arg5[%c0_52, %c0_53], %191 {strides = array<i32>} : memref<2x128xf32, #tpu.memory_space<vmem>>, vector<2x128xf32>,
    return
  }
  func.func @transform_0(%arg0: i32) -> (i32, i32, i32) {
    %c0_i32 = arith.constant 0 : i32
    %c0_i32_0 = arith.constant 0 : i32
    %c0_i32_1 = arith.constant 0 : i32
    return %arg0, %c0_i32, %c0_i32_0 : i32, i32, i32
  }
  func.func @transform_1(%arg0: i32) -> (i32, i32) {
    %c0_i32 = arith.constant 0 : i32
    %c0_i32_0 = arith.constant 0 : i32
    %c0_i32_1 = arith.constant 0 : i32
    return %c0_i32, %c0_i32_0 : i32, i32
  }
  func.func @transform_2(%arg0: i32) -> (i32, i32, i32) {
    %c0_i32 = arith.constant 0 : i32
    %c0_i32_0 = arith.constant 0 : i32
    %c0_i32_1 = arith.constant 0 : i32
    return %arg0, %c0_i32, %c0_i32_0 : i32, i32, i32
  }
}

</mosaic_0001>

<llo_original>
// kernel: lstm_a_v_forward.1
$region0: #{lstm_a_v_forward.1}
  #allocation0 [shape = 'u32[]', space=smem, size = 0x4, offset = 0x4, fixed_abs, tag = 'smem constant byte address 0x4 - core index']
  #allocation1 [shape = 'u32[72,128]{1,0:T(1,128)}', space=vmem, size = 0x9000, scoped, tag = 'internal scratch']
  #allocation2 [shape = 'f32[2,128]{1,0:T(2,128)}', space=vmem, size = 0x400, scoped, tag = 'scratch operand']
  #allocation3 [shape = 'f32[2,128]{1,0:T(2,128)}', space=vmem, size = 0x400, scoped, tag = 'scratch operand']
  %s0 = inlined_call_operand.vmem [shape: f32[8,2,512], index: 0, kind: input, shape index: {}]
  %s1 = inlined_call_operand.vmem [shape: f32[128,512], index: 1, kind: input, shape index: {}]
  %s2 = inlined_call_operand.vmem [shape: f32[8,2,128], index: 2, kind: output, shape index: {}]
  %s3 = sld [smem:[#allocation0]]
  $region22: #{lstm_a_v_forward.1} parent=0
    _
  %s5 = ssub.s32 1, %s3
  %s6 = scalar_select 0, %s5, %s3
  // Predicated region
  $region2: #{lstm_a_v_forward.1} parent=0 // pred_check
    _
  $region3: #{lstm_a_v_forward.1} parent=0 // pred_check_branch
    %8 = sbr.rel (0) target = $region5
  $region4: #{lstm_a_v_forward.1} parent=0 // pred_region
    _
  $region5: #{lstm_a_v_forward.1} parent=0 // pred_fallthru
    _
  // Predicated region
  $region6: #{lstm_a_v_forward.1} parent=0 // pred_check
    _
  $region7: #{lstm_a_v_forward.1} parent=0 // pred_check_branch
    %10 = sbr.rel (0) target = $region9
  $region8: #{lstm_a_v_forward.1} parent=0 // pred_region
    _
  $region9: #{lstm_a_v_forward.1} parent=0 // pred_fallthru
    _
  %p11 = scmp.eq.s32.totalorder 0, 0
  // Predicated region
  $region10: #{lstm_a_v_forward.1} parent=0 // pred_check
    %p12 = pneg %p11
  $region11: #{lstm_a_v_forward.1} parent=0 // pred_check_branch
    %14 = sbr.rel (%p12) target = $region13
  $region12: #{lstm_a_v_forward.1} parent=0 // pred_region
    %15 = vst [vmem:[#allocation2] sm:$0x3] 0.0
    %16 = vst [vmem:[#allocation3] sm:$0x3] 0.0
  $region13: #{lstm_a_v_forward.1} parent=0 // pred_fallthru
    _
  %v17 = vld [vmem:[%s1] sm:$0xff]
  %v18 = vld [vmem:[%s1 + $0x8] sm:$0xff]
  %v19 = vld [vmem:[%s1 + $0x10] sm:$0xff]
  %v20 = vld [vmem:[%s1 + $0x18] sm:$0xff]
  %v21 = vld [vmem:[%s1 + $0x20] sm:$0xff]
  %v22 = vld [vmem:[%s1 + $0x28] sm:$0xff]
  %v23 = vld [vmem:[%s1 + $0x30] sm:$0xff]
  %v24 = vld [vmem:[%s1 + $0x38] sm:$0xff]
  %v25 = vld [vmem:[%s1 + $0x40] sm:$0xff]
  %v26 = vld [vmem:[%s1 + $0x48] sm:$0xff]
  %v27 = vld [vmem:[%s1 + $0x50] sm:$0xff]
  %v28 = vld [vmem:[%s1 + $0x58] sm:$0xff]
  %v29 = vld [vmem:[%s1 + $0x60] sm:$0xff]
  %v30 = vld [vmem:[%s1 + $0x68] sm:$0xff]
  %v31 = vld [vmem:[%s1 + $0x70] sm:$0xff]
  %v32 = vld [vmem:[%s1 + $0x78] sm:$0xff]
  %v33 = vld [vmem:[%s1 + $0x80] sm:$0xff]
  %v34 = vld [vmem:[%s1 + $0x88] sm:$0xff]
  %v35 = vld [vmem:[%s1 + $0x90] sm:$0xff]
  %v36 = vld [vmem:[%s1 + $0x98] sm:$0xff]
  %v37 = vld [vmem:[%s1 + $0xa0] sm:$0xff]
  %v38 = vld [vmem:[%s1 + $0xa8] sm:$0xff]
  %v39 = vld [vmem:[%s1 + $0xb0] sm:$0xff]
  %v40 = vld [vmem:[%s1 + $0xb8] sm:$0xff]
  %v41 = vld [vmem:[%s1 + $0xc0] sm:$0xff]
  %v42 = vld [vmem:[%s1 + $0xc8] sm:$0xff]
  %v43 = vld [vmem:[%s1 + $0xd0] sm:$0xff]
  %v44 = vld [vmem:[%s1 + $0xd8] sm:$0xff]
  %v45 = vld [vmem:[%s1 + $0xe0] sm:$0xff]
  %v46 = vld [vmem:[%s1 + $0xe8] sm:$0xff]
  %v47 = vld [vmem:[%s1 + $0xf0] sm:$0xff]
  %v48 = vld [vmem:[%s1 + $0xf8] sm:$0xff]
  %v49 = vld [vmem:[%s1 + $0x100] sm:$0xff]
  %v50 = vld [vmem:[%s1 + $0x108] sm:$0xff]
  %v51 = vld [vmem:[%s1 + $0x110] sm:$0xff]
  %v52 = vld [vmem:[%s1 + $0x118] sm:$0xff]
  %v53 = vld [vmem:[%s1 + $0x120] sm:$0xff]
  %v54 = vld [vmem:[%s1 + $0x128] sm:$0xff]
  %v55 = vld [vmem:[%s1 + $0x130] sm:$0xff]
  %v56 = vld [vmem:[%s1 + $0x138] sm:$0xff]
  %v57 = vld [vmem:[%s1 + $0x140] sm:$0xff]
  %v58 = vld [vmem:[%s1 + $0x148] sm:$0xff]
  %v59 = vld [vmem:[%s1 + $0x150] sm:$0xff]
  %v60 = vld [vmem:[%s1 + $0x158] sm:$0xff]
  %v61 = vld [vmem:[%s1 + $0x160] sm:$0xff]
  %v62 = vld [vmem:[%s1 + $0x168] sm:$0xff]
  %v63 = vld [vmem:[%s1 + $0x170] sm:$0xff]
  %v64 = vld [vmem:[%s1 + $0x178] sm:$0xff]
  %v65 = vld [vmem:[%s1 + $0x180] sm:$0xff]
  %v66 = vld [vmem:[%s1 + $0x188] sm:$0xff]
  %v67 = vld [vmem:[%s1 + $0x190] sm:$0xff]
  %v68 = vld [vmem:[%s1 + $0x198] sm:$0xff]
  %v69 = vld [vmem:[%s1 + $0x1a0] sm:$0xff]
  %v70 = vld [vmem:[%s1 + $0x1a8] sm:$0xff]
  %v71 = vld [vmem:[%s1 + $0x1b0] sm:$0xff]
  %v72 = vld [vmem:[%s1 + $0x1b8] sm:$0xff]
  %v73 = vld [vmem:[%s1 + $0x1c0] sm:$0xff]
  %v74 = vld [vmem:[%s1 + $0x1c8] sm:$0xff]
  %v75 = vld [vmem:[%s1 + $0x1d0] sm:$0xff]
  %v76 = vld [vmem:[%s1 + $0x1d8] sm:$0xff]
  %v77 = vld [vmem:[%s1 + $0x1e0] sm:$0xff]
  %v78 = vld [vmem:[%s1 + $0x1e8] sm:$0xff]
  %v79 = vld [vmem:[%s1 + $0x1f0] sm:$0xff]
  %v80 = vld [vmem:[%s1 + $0x1f8] sm:$0xff]
  %v81 = vlaneseq
  %v82 = vand.u32 %v81, 127
  %v83 = vadd.s32 %v82, 128
  %v84 = vadd.s32 %v82, 256
  %v85 = vadd.s32 %v82, 384
  %vm86 = vcmp.ge.s32.totalorder %v82, 256
  %vm87 = vcmp.ge.s32.totalorder %v83, 256
  %vm88 = vcmp.ge.s32.totalorder %v84, 256
  %vm89 = vcmp.ge.s32.totalorder %v85, 256
  %vm90 = vcmp.lt.s32.totalorder %v82, 384
  %vm91 = vcmp.lt.s32.totalorder %v83, 384
  %vm92 = vcmp.lt.s32.totalorder %v84, 384
  %vm93 = vcmp.lt.s32.totalorder %v85, 384
  %vm94 = vmand %vm86, %vm90
  %vm95 = vmand %vm87, %vm91
  %vm96 = vmand %vm88, %vm92
  %vm97 = vmand %vm89, %vm93
  %v98 = vsel %vm94, 1.0, 0.5
  %v99 = vsel %vm95, 1.0, 0.5
  %v100 = vsel %vm96, 1.0, 0.5
  %v101 = vsel %vm97, 1.0, 0.5
  %v102 = vsel %vm94, 0.0, 0.5
  %v103 = vsel %vm95, 0.0, 0.5
  %v104 = vsel %vm96, 0.0, 0.5
  %v105 = vsel %vm97, 0.0, 0.5
  %v106 = vld [vmem:[#allocation2] sm:$0x3]
  %v107 = vld [vmem:[#allocation3] sm:$0x3]
  %v108 = vld [vmem:[%s0] sm:$0xff]
  %109 = vmatpush.msra.mxu0 %v77
  %110 = vmatpush.msra.mxu0 %v73
  %111 = vmatpush.msra.mxu0 %v69
  %112 = vmatpush.msra.mxu0 %v65
  %113 = vmatpush.msra.mxu0 %v61
  %114 = vmatpush.msra.mxu0 %v57
  %115 = vmatpush.msra.mxu0 %v53
  %116 = vmatpush.msra.mxu0 %v49
  %117 = vmatpush.msra.mxu0 %v45
  %118 = vmatpush.msra.mxu0 %v41
  %119 = vmatpush.msra.mxu0 %v37
  %120 = vmatpush.msra.mxu0 %v33
  %121 = vmatpush.msra.mxu0 %v29
  %122 = vmatpush.msra.mxu0 %v25
  %123 = vmatpush.msra.mxu0 %v21
  %124 = vmatpush.msra.mxu0 %v17
  %125 = vmatmul.f32.gmra.mxu0 %v106
  %v126 = vpop.f32.mrf.mxu0
  %v127 = vadd.f32 0.0, %v126
  %128 = vdwg.mxu0
  %129 = vmatpush.msra.mxu0 %v78
  %130 = vmatpush.msra.mxu0 %v74
  %131 = vmatpush.msra.mxu0 %v70
  %132 = vmatpush.msra.mxu0 %v66
  %133 = vmatpush.msra.mxu0 %v62
  %134 = vmatpush.msra.mxu0 %v58
  %135 = vmatpush.msra.mxu0 %v54
  %136 = vmatpush.msra.mxu0 %v50
  %137 = vmatpush.msra.mxu0 %v46
  %138 = vmatpush.msra.mxu0 %v42
  %139 = vmatpush.msra.mxu0 %v38
  %140 = vmatpush.msra.mxu0 %v34
  %141 = vmatpush.msra.mxu0 %v30
  %142 = vmatpush.msra.mxu0 %v26
  %143 = vmatpush.msra.mxu0 %v22
  %144 = vmatpush.msra.mxu0 %v18
  %145 = vmatmul.f32.gmra.mxu0 %v106
  %v146 = vpop.f32.mrf.mxu0
  %v147 = vadd.f32 0.0, %v146
  %148 = vdwg.mxu0
  %149 = vmatpush.msra.mxu0 %v79
  %150 = vmatpush.msra.mxu0 %v75
  %151 = vmatpush.msra.mxu0 %v71
  %152 = vmatpush.msra.mxu0 %v67
  %153 = vmatpush.msra.mxu0 %v63
  %154 = vmatpush.msra.mxu0 %v59
  %155 = vmatpush.msra.mxu0 %v55
  %156 = vmatpush.msra.mxu0 %v51
  %157 = vmatpush.msra.mxu0 %v47
  %158 = vmatpush.msra.mxu0 %v43
  %159 = vmatpush.msra.mxu0 %v39
  %160 = vmatpush.msra.mxu0 %v35
  %161 = vmatpush.msra.mxu0 %v31
  %162 = vmatpush.msra.mxu0 %v27
  %163 = vmatpush.msra.mxu0 %v23
  %164 = vmatpush.msra.mxu0 %v19
  %165 = vmatmul.f32.gmra.mxu0 %v106
  %v166 = vpop.f32.mrf.mxu0
  %v167 = vadd.f32 0.0, %v166
  %168 = vdwg.mxu0
  %169 = vmatpush.msra.mxu0 %v80
  %170 = vmatpush.msra.mxu0 %v76
  %171 = vmatpush.msra.mxu0 %v72
  %172 = vmatpush.msra.mxu0 %v68
  %173 = vmatpush.msra.mxu0 %v64
  %174 = vmatpush.msra.mxu0 %v60
  %175 = vmatpush.msra.mxu0 %v56
  %176 = vmatpush.msra.mxu0 %v52
  %177 = vmatpush.msra.mxu0 %v48
  %178 = vmatpush.msra.mxu0 %v44
  %179 = vmatpush.msra.mxu0 %v40
  %180 = vmatpush.msra.mxu0 %v36
  %181 = vmatpush.msra.mxu0 %v32
  %182 = vmatpush.msra.mxu0 %v28
  %183 = vmatpush.msra.mxu0 %v24
  %184 = vmatpush.msra.mxu0 %v20
  %185 = vmatmul.f32.gmra.mxu0 %v106
  %v186 = vpop.f32.mrf.mxu0
  %v187 = vadd.f32 0.0, %v186
  %188 = vdwg.mxu0
  %v193 = vrot.slane %v147, 6
  %v194 = vrot.slane %v167, 4
  %v195 = vrot.slane %v187, 2
  %vm196 = vcmask 1041408
  %v197 = vsel %vm196, %v127, %v193
  %vm198 = vcmask 1045508
  %v199 = vsel %vm198, %v194, %v195
  %vm200 = vcmask 1043456
  %v201 = vsel %vm200, %v197, %v199
  %v203 = vadd.f32 %v108, %v201
  %205 = vst [vmem:[#allocation1] ss:$4 sm:$0xff] %v203
  %v206 = vld.sshfl [vmem:[#allocation1] sm:$0xff pattern:$0x73625140]
  %v207 = vld.sshfl [vmem:[#allocation1 + $0x8] sm:$0xff pattern:$0x73625140]
  %v208 = vld.sshfl [vmem:[#allocation1 + $0x10] sm:$0xff pattern:$0x73625140]
  %v209 = vld.sshfl [vmem:[#allocation1 + $0x18] sm:$0xff pattern:$0x73625140]
  %v214 = vmul.f32 %v98, %v206
  %v215 = vmul.f32 %v99, %v207
  %v216 = vmul.f32 %v100, %v208
  %v217 = vmul.f32 %v101, %v209
  %v218 = vtanh.pop %v214
  %v219 = vtanh.pop %v215
  %v220 = vtanh.pop %v216
  %v221 = vtanh.pop %v217
  %v222 = vmul.f32 %v98, %v218
  %v223 = vmul.f32 %v99, %v219
  %v224 = vmul.f32 %v100, %v220
  %v225 = vmul.f32 %v101, %v221
  %v226 = vadd.f32 %v222, %v102
  %v227 = vadd.f32 %v223, %v103
  %v228 = vadd.f32 %v224, %v104
  %v229 = vadd.f32 %v225, %v105
  %v230 = vmul.f32 %v227, %v107
  %v231 = vmul.f32 %v226, %v228
  %v232 = vadd.f32 %v230, %v231
  %v233 = vtanh.pop %v232
  %v234 = vmul.f32 %v229, %v233
  %235 = vst [vmem:[%s2] sm:$0x3] %v234
  %s236 = scalar_lea.vmem %s0, 8
  %v237 = vld [vmem:[%s236] sm:$0xff]
  %238 = vmatpush.msra.mxu0 %v77
  %239 = vmatpush.msra.mxu0 %v73
  %240 = vmatpush.msra.mxu0 %v69
  %241 = vmatpush.msra.mxu0 %v65
  %242 = vmatpush.msra.mxu0 %v61
  %243 = vmatpush.msra.mxu0 %v57
  %244 = vmatpush.msra.mxu0 %v53
  %245 = vmatpush.msra.mxu0 %v49
  %246 = vmatpush.msra.mxu0 %v45
  %247 = vmatpush.msra.mxu0 %v41
  %248 = vmatpush.msra.mxu0 %v37
  %249 = vmatpush.msra.mxu0 %v33
  %250 = vmatpush.msra.mxu0 %v29
  %251 = vmatpush.msra.mxu0 %v25
  %252 = vmatpush.msra.mxu0 %v21
  %253 = vmatpush.msra.mxu0 %v17
  %254 = vmatmul.f32.gmra.mxu0 %v234
  %v255 = vpop.f32.mrf.mxu0
  %v256 = vadd.f32 0.0, %v255
  %257 = vdwg.mxu0
  %258 = vmatpush.msra.mxu0 %v78
  %259 = vmatpush.msra.mxu0 %v74
  %260 = vmatpush.msra.mxu0 %v70
  %261 = vmatpush.msra.mxu0 %v66
  %262 = vmatpush.msra.mxu0 %v62
  %263 = vmatpush.msra.mxu0 %v58
  %264 = vmatpush.msra.mxu0 %v54
  %265 = vmatpush.msra.mxu0 %v50
  %266 = vmatpush.msra.mxu0 %v46
  %267 = vmatpush.msra.mxu0 %v42
  %268 = vmatpush.msra.mxu0 %v38
  %269 = vmatpush.msra.mxu0 %v34
  %270 = vmatpush.msra.mxu0 %v30
  %271 = vmatpush.msra.mxu0 %v26
  %272 = vmatpush.msra.mxu0 %v22
  %273 = vmatpush.msra.mxu0 %v18
  %274 = vmatmul.f32.gmra.mxu0 %v234
  %v275 = vpop.f32.mrf.mxu0
  %v276 = vadd.f32 0.0, %v275
  %277 = vdwg.mxu0
  %278 = vmatpush.msra.mxu0 %v79
  %279 = vmatpush.msra.mxu0 %v75
  %280 = vmatpush.msra.mxu0 %v71
  %281 = vmatpush.msra.mxu0 %v67
  %282 = vmatpush.msra.mxu0 %v63
  %283 = vmatpush.msra.mxu0 %v59
  %284 = vmatpush.msra.mxu0 %v55
  %285 = vmatpush.msra.mxu0 %v51
  %286 = vmatpush.msra.mxu0 %v47
  %287 = vmatpush.msra.mxu0 %v43
  %288 = vmatpush.msra.mxu0 %v39
  %289 = vmatpush.msra.mxu0 %v35
  %290 = vmatpush.msra.mxu0 %v31
  %291 = vmatpush.msra.mxu0 %v27
  %292 = vmatpush.msra.mxu0 %v23
  %293 = vmatpush.msra.mxu0 %v19
  %294 = vmatmul.f32.gmra.mxu0 %v234
  %v295 = vpop.f32.mrf.mxu0
  %v296 = vadd.f32 0.0, %v295
  %297 = vdwg.mxu0
  %298 = vmatpush.msra.mxu0 %v80
  %299 = vmatpush.msra.mxu0 %v76
  %300 = vmatpush.msra.mxu0 %v72
  %301 = vmatpush.msra.mxu0 %v68
  %302 = vmatpush.msra.mxu0 %v64
  %303 = vmatpush.msra.mxu0 %v60
  %304 = vmatpush.msra.mxu0 %v56
  %305 = vmatpush.msra.mxu0 %v52
  %306 = vmatpush.msra.mxu0 %v48
  %307 = vmatpush.msra.mxu0 %v44
  %308 = vmatpush.msra.mxu0 %v40
  %309 = vmatpush.msra.mxu0 %v36
  %310 = vmatpush.msra.mxu0 %v32
  %311 = vmatpush.msra.mxu0 %v28
  %312 = vmatpush.msra.mxu0 %v24
  %313 = vmatpush.msra.mxu0 %v20
  %314 = vmatmul.f32.gmra.mxu0 %v234
  %v315 = vpop.f32.mrf.mxu0
  %v316 = vadd.f32 0.0, %v315
  %317 = vdwg.mxu0
  %v322 = vrot.slane %v276, 6
  %v323 = vrot.slane %v296, 4
  %v324 = vrot.slane %v316, 2
  %v325 = vsel %vm196, %v256, %v322
  %v326 = vsel %vm198, %v323, %v324
  %v327 = vsel %vm200, %v325, %v326
  %v329 = vadd.f32 %v237, %v327
  %331 = vst [vmem:[#allocation1] ss:$4 sm:$0xff] %v329
  %v332 = vld.sshfl [vmem:[#allocation1] sm:$0xff pattern:$0x73625140]
  %v333 = vld.sshfl [vmem:[#allocation1 + $0x8] sm:$0xff pattern:$0x73625140]
  %v334 = vld.sshfl [vmem:[#allocation1 + $0x10] sm:$0xff pattern:$0x73625140]
  %v335 = vld.sshfl [vmem:[#allocation1 + $0x18] sm:$0xff pattern:$0x73625140]
  %v340 = vmul.f32 %v98, %v332
  %v341 = vmul.f32 %v99, %v333
  %v342 = vmul.f32 %v100, %v334
  %v343 = vmul.f32 %v101, %v335
  %v344 = vtanh.pop %v340
  %v345 = vtanh.pop %v341
  %v346 = vtanh.pop %v342
  %v347 = vtanh.pop %v343
  %v348 = vmul.f32 %v98, %v344
  %v349 = vmul.f32 %v99, %v345
  %v350 = vmul.f32 %v100, %v346
  %v351 = vmul.f32 %v101, %v347
  %v352 = vadd.f32 %v348, %v102
  %v353 = vadd.f32 %v349, %v103
  %v354 = vadd.f32 %v350, %v104
  %v355 = vadd.f32 %v351, %v105
  %v356 = vmul.f32 %v353, %v232
  %v357 = vmul.f32 %v352, %v354
  %v358 = vadd.f32 %v356, %v357
  %v359 = vtanh.pop %v358
  %v360 = vmul.f32 %v355, %v359
  %s361 = scalar_lea.vmem %s2, 2
  %362 = vst [vmem:[%s361] sm:$0x3] %v360
  %s363 = scalar_lea.vmem %s0, 16
  %v364 = vld [vmem:[%s363] sm:$0xff]
  %365 = vmatpush.msra.mxu0 %v77
  %366 = vmatpush.msra.mxu0 %v73
  %367 = vmatpush.msra.mxu0 %v69
  %368 = vmatpush.msra.mxu0 %v65
  %369 = vmatpush.msra.mxu0 %v61
  %370 = vmatpush.msra.mxu0 %v57
  %371 = vmatpush.msra.mxu0 %v53
  %372 = vmatpush.msra.mxu0 %v49
  %373 = vmatpush.msra.mxu0 %v45
  %374 = vmatpush.msra.mxu0 %v41
  %375 = vmatpush.msra.mxu0 %v37
  %376 = vmatpush.msra.mxu0 %v33
  %377 = vmatpush.msra.mxu0 %v29
  %378 = vmatpush.msra.mxu0 %v25
  %379 = vmatpush.msra.mxu0 %v21
  %380 = vmatpush.msra.mxu0 %v17
  %381 = vmatmul.f32.gmra.mxu0 %v360
  %v382 = vpop.f32.mrf.mxu0
  %v383 = vadd.f32 0.0, %v382
  %384 = vdwg.mxu0
  %385 = vmatpush.msra.mxu0 %v78
  %386 = vmatpush.msra.mxu0 %v74
  %387 = vmatpush.msra.mxu0 %v70
  %388 = vmatpush.msra.mxu0 %v66
  %389 = vmatpush.msra.mxu0 %v62
  %390 = vmatpush.msra.mxu0 %v58
  %391 = vmatpush.msra.mxu0 %v54
  %392 = vmatpush.msra.mxu0 %v50
  %393 = vmatpush.msra.mxu0 %v46
  %394 = vmatpush.msra.mxu0 %v42
  %395 = vmatpush.msra.mxu0 %v38
  %396 = vmatpush.msra.mxu0 %v34
  %397 = vmatpush.msra.mxu0 %v30
  %398 = vmatpush.msra.mxu0 %v26
  %399 = vmatpush.msra.mxu0 %v22
  %400 = vmatpush.msra.mxu0 %v18
  %401 = vmatmul.f32.gmra.mxu0 %v360
  %v402 = vpop.f32.mrf.mxu0
  %v403 = vadd.f32 0.0, %v402
  %404 = vdwg.mxu0
  %405 = vmatpush.msra.mxu0 %v79
  %406 = vmatpush.msra.mxu0 %v75
  %407 = vmatpush.msra.mxu0 %v71
  %408 = vmatpush.msra.mxu0 %v67
  %409 = vmatpush.msra.mxu0 %v63
  %410 = vmatpush.msra.mxu0 %v59
  %411 = vmatpush.msra.mxu0 %v55
  %412 = vmatpush.msra.mxu0 %v51
  %413 = vmatpush.msra.mxu0 %v47
  %414 = vmatpush.msra.mxu0 %v43
  %415 = vmatpush.msra.mxu0 %v39
  %416 = vmatpush.msra.mxu0 %v35
  %417 = vmatpush.msra.mxu0 %v31
  %418 = vmatpush.msra.mxu0 %v27
  %419 = vmatpush.msra.mxu0 %v23
  %420 = vmatpush.msra.mxu0 %v19
  %421 = vmatmul.f32.gmra.mxu0 %v360
  %v422 = vpop.f32.mrf.mxu0
  %v423 = vadd.f32 0.0, %v422
  %424 = vdwg.mxu0
  %425 = vmatpush.msra.mxu0 %v80
  %426 = vmatpush.msra.mxu0 %v76
  %427 = vmatpush.msra.mxu0 %v72
  %428 = vmatpush.msra.mxu0 %v68
  %429 = vmatpush.msra.mxu0 %v64
  %430 = vmatpush.msra.mxu0 %v60
  %431 = vmatpush.msra.mxu0 %v56
  %432 = vmatpush.msra.mxu0 %v52
  %433 = vmatpush.msra.mxu0 %v48
  %434 = vmatpush.msra.mxu0 %v44
  %435 = vmatpush.msra.mxu0 %v40
  %436 = vmatpush.msra.mxu0 %v36
  %437 = vmatpush.msra.mxu0 %v32
  %438 = vmatpush.msra.mxu0 %v28
  %439 = vmatpush.msra.mxu0 %v24
  %440 = vmatpush.msra.mxu0 %v20
  %441 = vmatmul.f32.gmra.mxu0 %v360
  %v442 = vpop.f32.mrf.mxu0
  %v443 = vadd.f32 0.0, %v442
  %444 = vdwg.mxu0
  %v449 = vrot.slane %v403, 6
  %v450 = vrot.slane %v423, 4
  %v451 = vrot.slane %v443, 2
  %v452 = vsel %vm196, %v383, %v449
  %v453 = vsel %vm198, %v450, %v451
  %v454 = vsel %vm200, %v452, %v453
  %v456 = vadd.f32 %v364, %v454
  %458 = vst [vmem:[#allocation1] ss:$4 sm:$0xff] %v456
  %v459 = vld.sshfl [vmem:[#allocation1] sm:$0xff pattern:$0x73625140]
  %v460 = vld.sshfl [vmem:[#allocation1 + $0x8] sm:$0xff pattern:$0x73625140]
  %v461 = vld.sshfl [vmem:[#allocation1 + $0x10] sm:$0xff pattern:$0x73625140]
  %v462 = vld.sshfl [vmem:[#allocation1 + $0x18] sm:$0xff pattern:$0x73625140]
  %v467 = vmul.f32 %v98, %v459
  %v468 = vmul.f32 %v99, %v460
  %v469 = vmul.f32 %v100, %v461
  %v470 = vmul.f32 %v101, %v462
  %v471 = vtanh.pop %v467
  %v472 = vtanh.pop %v468
  %v473 = vtanh.pop %v469
  %v474 = vtanh.pop %v470
  %v475 = vmul.f32 %v98, %v471
  %v476 = vmul.f32 %v99, %v472
  %v477 = vmul.f32 %v100, %v473
  %v478 = vmul.f32 %v101, %v474
  %v479 = vadd.f32 %v475, %v102
  %v480 = vadd.f32 %v476, %v103
  %v481 = vadd.f32 %v477, %v104
  %v482 = vadd.f32 %v478, %v105
  %v483 = vmul.f32 %v480, %v358
  %v484 = vmul.f32 %v479, %v481
  %v485 = vadd.f32 %v483, %v484
  %v486 = vtanh.pop %v485
  %v487 = vmul.f32 %v482, %v486
  %s488 = scalar_lea.vmem %s2, 4
  %489 = vst [vmem:[%s488] sm:$0x3] %v487
  %s490 = scalar_lea.vmem %s0, 24
  %v491 = vld [vmem:[%s490] sm:$0xff]
  %492 = vmatpush.msra.mxu0 %v77
  %493 = vmatpush.msra.mxu0 %v73
  %494 = vmatpush.msra.mxu0 %v69
  %495 = vmatpush.msra.mxu0 %v65
  %496 = vmatpush.msra.mxu0 %v61
  %497 = vmatpush.msra.mxu0 %v57
  %498 = vmatpush.msra.mxu0 %v53
  %499 = vmatpush.msra.mxu0 %v49
  %500 = vmatpush.msra.mxu0 %v45
  %501 = vmatpush.msra.mxu0 %v41
  %502 = vmatpush.msra.mxu0 %v37
  %503 = vmatpush.msra.mxu0 %v33
  %504 = vmatpush.msra.mxu0 %v29
  %505 = vmatpush.msra.mxu0 %v25
  %506 = vmatpush.msra.mxu0 %v21
  %507 = vmatpush.msra.mxu0 %v17
  %508 = vmatmul.f32.gmra.mxu0 %v487
  %v509 = vpop.f32.mrf.mxu0
  %v510 = vadd.f32 0.0, %v509
  %511 = vdwg.mxu0
  %512 = vmatpush.msra.mxu0 %v78
  %513 = vmatpush.msra.mxu0 %v74
  %514 = vmatpush.msra.mxu0 %v70
  %515 = vmatpush.msra.mxu0 %v66
  %516 = vmatpush.msra.mxu0 %v62
  %517 = vmatpush.msra.mxu0 %v58
  %518 = vmatpush.msra.mxu0 %v54
  %519 = vmatpush.msra.mxu0 %v50
  %520 = vmatpush.msra.mxu0 %v46
  %521 = vmatpush.msra.mxu0 %v42
  %522 = vmatpush.msra.mxu0 %v38
  %523 = vmatpush.msra.mxu0 %v34
  %524 = vmatpush.msra.mxu0 %v30
  %525 = vmatpush.msra.mxu0 %v26
  %526 = vmatpush.msra.mxu0 %v22
  %527 = vmatpush.msra.mxu0 %v18
  %528 = vmatmul.f32.gmra.mxu0 %v487
  %v529 = vpop.f32.mrf.mxu0
  %v530 = vadd.f32 0.0, %v529
  %531 = vdwg.mxu0
  %532 = vmatpush.msra.mxu0 %v79
  %533 = vmatpush.msra.mxu0 %v75
  %534 = vmatpush.msra.mxu0 %v71
  %535 = vmatpush.msra.mxu0 %v67
  %536 = vmatpush.msra.mxu0 %v63
  %537 = vmatpush.msra.mxu0 %v59
  %538 = vmatpush.msra.mxu0 %v55
  %539 = vmatpush.msra.mxu0 %v51
  %540 = vmatpush.msra.mxu0 %v47
  %541 = vmatpush.msra.mxu0 %v43
  %542 = vmatpush.msra.mxu0 %v39
  %543 = vmatpush.msra.mxu0 %v35
  %544 = vmatpush.msra.mxu0 %v31
  %545 = vmatpush.msra.mxu0 %v27
  %546 = vmatpush.msra.mxu0 %v23
  %547 = vmatpush.msra.mxu0 %v19
  %548 = vmatmul.f32.gmra.mxu0 %v487
  %v549 = vpop.f32.mrf.mxu0
  %v550 = vadd.f32 0.0, %v549
  %551 = vdwg.mxu0
  %552 = vmatpush.msra.mxu0 %v80
  %553 = vmatpush.msra.mxu0 %v76
  %554 = vmatpush.msra.mxu0 %v72
  %555 = vmatpush.msra.mxu0 %v68
  %556 = vmatpush.msra.mxu0 %v64
  %557 = vmatpush.msra.mxu0 %v60
  %558 = vmatpush.msra.mxu0 %v56
  %559 = vmatpush.msra.mxu0 %v52
  %560 = vmatpush.msra.mxu0 %v48
  %561 = vmatpush.msra.mxu0 %v44
  %562 = vmatpush.msra.mxu0 %v40
  %563 = vmatpush.msra.mxu0 %v36
  %564 = vmatpush.msra.mxu0 %v32
  %565 = vmatpush.msra.mxu0 %v28
  %566 = vmatpush.msra.mxu0 %v24
  %567 = vmatpush.msra.mxu0 %v20
  %568 = vmatmul.f32.gmra.mxu0 %v487
  %v569 = vpop.f32.mrf.mxu0
  %v570 = vadd.f32 0.0, %v569
  %571 = vdwg.mxu0
  %v576 = vrot.slane %v530, 6
  %v577 = vrot.slane %v550, 4
  %v578 = vrot.slane %v570, 2
  %v579 = vsel %vm196, %v510, %v576
  %v580 = vsel %vm198, %v577, %v578
  %v581 = vsel %vm200, %v579, %v580
  %v583 = vadd.f32 %v491, %v581
  %585 = vst [vmem:[#allocation1] ss:$4 sm:$0xff] %v583
  %v586 = vld.sshfl [vmem:[#allocation1] sm:$0xff pattern:$0x73625140]
  %v587 = vld.sshfl [vmem:[#allocation1 + $0x8] sm:$0xff pattern:$0x73625140]
  %v588 = vld.sshfl [vmem:[#allocation1 + $0x10] sm:$0xff pattern:$0x73625140]
  %v589 = vld.sshfl [vmem:[#allocation1 + $0x18] sm:$0xff pattern:$0x73625140]
  %v594 = vmul.f32 %v98, %v586
  %v595 = vmul.f32 %v99, %v587
  %v596 = vmul.f32 %v100, %v588
  %v597 = vmul.f32 %v101, %v589
  %v598 = vtanh.pop %v594
  %v599 = vtanh.pop %v595
  %v600 = vtanh.pop %v596
  %v601 = vtanh.pop %v597
  %v602 = vmul.f32 %v98, %v598
  %v603 = vmul.f32 %v99, %v599
  %v604 = vmul.f32 %v100, %v600
  %v605 = vmul.f32 %v101, %v601
  %v606 = vadd.f32 %v602, %v102
  %v607 = vadd.f32 %v603, %v103
  %v608 = vadd.f32 %v604, %v104
  %v609 = vadd.f32 %v605, %v105
  %v610 = vmul.f32 %v607, %v485
  %v611 = vmul.f32 %v606, %v608
  %v612 = vadd.f32 %v610, %v611
  %v613 = vtanh.pop %v612
  %v614 = vmul.f32 %v609, %v613
  %s615 = scalar_lea.vmem %s2, 6
  %616 = vst [vmem:[%s615] sm:$0x3] %v614
  %s617 = scalar_lea.vmem %s0, 32
  %v618 = vld [vmem:[%s617] sm:$0xff]
  %619 = vmatpush.msra.mxu0 %v77
  %620 = vmatpush.msra.mxu0 %v73
  %621 = vmatpush.msra.mxu0 %v69
  %622 = vmatpush.msra.mxu0 %v65
  %623 = vmatpush.msra.mxu0 %v61
  %624 = vmatpush.msra.mxu0 %v57
  %625 = vmatpush.msra.mxu0 %v53
  %626 = vmatpush.msra.mxu0 %v49
  %627 = vmatpush.msra.mxu0 %v45
  %628 = vmatpush.msra.mxu0 %v41
  %629 = vmatpush.msra.mxu0 %v37
  %630 = vmatpush.msra.mxu0 %v33
  %631 = vmatpush.msra.mxu0 %v29
  %632 = vmatpush.msra.mxu0 %v25
  %633 = vmatpush.msra.mxu0 %v21
  %634 = vmatpush.msra.mxu0 %v17
  %635 = vmatmul.f32.gmra.mxu0 %v614
  %v636 = vpop.f32.mrf.mxu0
  %v637 = vadd.f32 0.0, %v636
  %638 = vdwg.mxu0
  %639 = vmatpush.msra.mxu0 %v78
  %640 = vmatpush.msra.mxu0 %v74
  %641 = vmatpush.msra.mxu0 %v70
  %642 = vmatpush.msra.mxu0 %v66
  %643 = vmatpush.msra.mxu0 %v62
  %644 = vmatpush.msra.mxu0 %v58
  %645 = vmatpush.msra.mxu0 %v54
  %646 = vmatpush.msra.mxu0 %v50
  %647 = vmatpush.msra.mxu0 %v46
  %648 = vmatpush.msra.mxu0 %v42
  %649 = vmatpush.msra.mxu0 %v38
  %650 = vmatpush.msra.mxu0 %v34
  %651 = vmatpush.msra.mxu0 %v30
  %652 = vmatpush.msra.mxu0 %v26
  %653 = vmatpush.msra.mxu0 %v22
  %654 = vmatpush.msra.mxu0 %v18
  %655 = vmatmul.f32.gmra.mxu0 %v614
  %v656 = vpop.f32.mrf.mxu0
  %v657 = vadd.f32 0.0, %v656
  %658 = vdwg.mxu0
  %659 = vmatpush.msra.mxu0 %v79
  %660 = vmatpush.msra.mxu0 %v75
  %661 = vmatpush.msra.mxu0 %v71
  %662 = vmatpush.msra.mxu0 %v67
  %663 = vmatpush.msra.mxu0 %v63
  %664 = vmatpush.msra.mxu0 %v59
  %665 = vmatpush.msra.mxu0 %v55
  %666 = vmatpush.msra.mxu0 %v51
  %667 = vmatpush.msra.mxu0 %v47
  %668 = vmatpush.msra.mxu0 %v43
  %669 = vmatpush.msra.mxu0 %v39
  %670 = vmatpush.msra.mxu0 %v35
  %671 = vmatpush.msra.mxu0 %v31
  %672 = vmatpush.msra.mxu0 %v27
  %673 = vmatpush.msra.mxu0 %v23
  %674 = vmatpush.msra.mxu0 %v19
  %675 = vmatmul.f32.gmra.mxu0 %v614
  %v676 = vpop.f32.mrf.mxu0
  %v677 = vadd.f32 0.0, %v676
  %678 = vdwg.mxu0
  %679 = vmatpush.msra.mxu0 %v80
  %680 = vmatpush.msra.mxu0 %v76
  %681 = vmatpush.msra.mxu0 %v72
  %682 = vmatpush.msra.mxu0 %v68
  %683 = vmatpush.msra.mxu0 %v64
  %684 = vmatpush.msra.mxu0 %v60
  %685 = vmatpush.msra.mxu0 %v56
  %686 = vmatpush.msra.mxu0 %v52
  %687 = vmatpush.msra.mxu0 %v48
  %688 = vmatpush.msra.mxu0 %v44
  %689 = vmatpush.msra.mxu0 %v40
  %690 = vmatpush.msra.mxu0 %v36
  %691 = vmatpush.msra.mxu0 %v32
  %692 = vmatpush.msra.mxu0 %v28
  %693 = vmatpush.msra.mxu0 %v24
  %694 = vmatpush.msra.mxu0 %v20
  %695 = vmatmul.f32.gmra.mxu0 %v614
  %v696 = vpop.f32.mrf.mxu0
  %v697 = vadd.f32 0.0, %v696
  %698 = vdwg.mxu0
  %v703 = vrot.slane %v657, 6
  %v704 = vrot.slane %v677, 4
  %v705 = vrot.slane %v697, 2
  %v706 = vsel %vm196, %v637, %v703
  %v707 = vsel %vm198, %v704, %v705
  %v708 = vsel %vm200, %v706, %v707
  %v710 = vadd.f32 %v618, %v708
  %712 = vst [vmem:[#allocation1] ss:$4 sm:$0xff] %v710
  %v713 = vld.sshfl [vmem:[#allocation1] sm:$0xff pattern:$0x73625140]
  %v714 = vld.sshfl [vmem:[#allocation1 + $0x8] sm:$0xff pattern:$0x73625140]
  %v715 = vld.sshfl [vmem:[#allocation1 + $0x10] sm:$0xff pattern:$0x73625140]
  %v716 = vld.sshfl [vmem:[#allocation1 + $0x18] sm:$0xff pattern:$0x73625140]
  %v721 = vmul.f32 %v98, %v713
  %v722 = vmul.f32 %v99, %v714
  %v723 = vmul.f32 %v100, %v715
  %v724 = vmul.f32 %v101, %v716
  %v725 = vtanh.pop %v721
  %v726 = vtanh.pop %v722
  %v727 = vtanh.pop %v723
  %v728 = vtanh.pop %v724
  %v729 = vmul.f32 %v98, %v725
  %v730 = vmul.f32 %v99, %v726
  %v731 = vmul.f32 %v100, %v727
  %v732 = vmul.f32 %v101, %v728
  %v733 = vadd.f32 %v729, %v102
  %v734 = vadd.f32 %v730, %v103
  %v735 = vadd.f32 %v731, %v104
  %v736 = vadd.f32 %v732, %v105
  %v737 = vmul.f32 %v734, %v612
  %v738 = vmul.f32 %v733, %v735
  %v739 = vadd.f32 %v737, %v738
  %v740 = vtanh.pop %v739
  %v741 = vmul.f32 %v736, %v740
  %s742 = scalar_lea.vmem %s2, 8
  %743 = vst [vmem:[%s742] sm:$0x3] %v741
  %s744 = scalar_lea.vmem %s0, 40
  %v745 = vld [vmem:[%s744] sm:$0xff]
  %746 = vmatpush.msra.mxu0 %v77
  %747 = vmatpush.msra.mxu0 %v73
  %748 = vmatpush.msra.mxu0 %v69
  %749 = vmatpush.msra.mxu0 %v65
  %750 = vmatpush.msra.mxu0 %v61
  %751 = vmatpush.msra.mxu0 %v57
  %752 = vmatpush.msra.mxu0 %v53
  %753 = vmatpush.msra.mxu0 %v49
  %754 = vmatpush.msra.mxu0 %v45
  %755 = vmatpush.msra.mxu0 %v41
  %756 = vmatpush.msra.mxu0 %v37
  %757 = vmatpush.msra.mxu0 %v33
  %758 = vmatpush.msra.mxu0 %v29
  %759 = vmatpush.msra.mxu0 %v25
  %760 = vmatpush.msra.mxu0 %v21
  %761 = vmatpush.msra.mxu0 %v17
  %762 = vmatmul.f32.gmra.mxu0 %v741
  %v763 = vpop.f32.mrf.mxu0
  %v764 = vadd.f32 0.0, %v763
  %765 = vdwg.mxu0
  %766 = vmatpush.msra.mxu0 %v78
  %767 = vmatpush.msra.mxu0 %v74
  %768 = vmatpush.msra.mxu0 %v70
  %769 = vmatpush.msra.mxu0 %v66
  %770 = vmatpush.msra.mxu0 %v62
  %771 = vmatpush.msra.mxu0 %v58
  %772 = vmatpush.msra.mxu0 %v54
  %773 = vmatpush.msra.mxu0 %v50
  %774 = vmatpush.msra.mxu0 %v46
  %775 = vmatpush.msra.mxu0 %v42
  %776 = vmatpush.msra.mxu0 %v38
  %777 = vmatpush.msra.mxu0 %v34
  %778 = vmatpush.msra.mxu0 %v30
  %779 = vmatpush.msra.mxu0 %v26
  %780 = vmatpush.msra.mxu0 %v22
  %781 = vmatpush.msra.mxu0 %v18
  %782 = vmatmul.f32.gmra.mxu0 %v741
  %v783 = vpop.f32.mrf.mxu0
  %v784 = vadd.f32 0.0, %v783
  %785 = vdwg.mxu0
  %786 = vmatpush.msra.mxu0 %v79
  %787 = vmatpush.msra.mxu0 %v75
  %788 = vmatpush.msra.mxu0 %v71
  %789 = vmatpush.msra.mxu0 %v67
  %790 = vmatpush.msra.mxu0 %v63
  %791 = vmatpush.msra.mxu0 %v59
  %792 = vmatpush.msra.mxu0 %v55
  %793 = vmatpush.msra.mxu0 %v51
  %794 = vmatpush.msra.mxu0 %v47
  %795 = vmatpush.msra.mxu0 %v43
  %796 = vmatpush.msra.mxu0 %v39
  %797 = vmatpush.msra.mxu0 %v35
  %798 = vmatpush.msra.mxu0 %v31
  %799 = vmatpush.msra.mxu0 %v27
  %800 = vmatpush.msra.mxu0 %v23
  %801 = vmatpush.msra.mxu0 %v19
  %802 = vmatmul.f32.gmra.mxu0 %v741
  %v803 = vpop.f32.mrf.mxu0
  %v804 = vadd.f32 0.0, %v803
  %805 = vdwg.mxu0
  %806 = vmatpush.msra.mxu0 %v80
  %807 = vmatpush.msra.mxu0 %v76
  %808 = vmatpush.msra.mxu0 %v72
  %809 = vmatpush.msra.mxu0 %v68
  %810 = vmatpush.msra.mxu0 %v64
  %811 = vmatpush.msra.mxu0 %v60
  %812 = vmatpush.msra.mxu0 %v56
  %813 = vmatpush.msra.mxu0 %v52
  %814 = vmatpush.msra.mxu0 %v48
  %815 = vmatpush.msra.mxu0 %v44
  %816 = vmatpush.msra.mxu0 %v40
  %817 = vmatpush.msra.mxu0 %v36
  %818 = vmatpush.msra.mxu0 %v32
  %819 = vmatpush.msra.mxu0 %v28
  %820 = vmatpush.msra.mxu0 %v24
  %821 = vmatpush.msra.mxu0 %v20
  %822 = vmatmul.f32.gmra.mxu0 %v741
  %v823 = vpop.f32.mrf.mxu0
  %v824 = vadd.f32 0.0, %v823
  %825 = vdwg.mxu0
  %v830 = vrot.slane %v784, 6
  %v831 = vrot.slane %v804, 4
  %v832 = vrot.slane %v824, 2
  %v833 = vsel %vm196, %v764, %v830
  %v834 = vsel %vm198, %v831, %v832
  %v835 = vsel %vm200, %v833, %v834
  %v837 = vadd.f32 %v745, %v835
  %839 = vst [vmem:[#allocation1] ss:$4 sm:$0xff] %v837
  %v840 = vld.sshfl [vmem:[#allocation1] sm:$0xff pattern:$0x73625140]
  %v841 = vld.sshfl [vmem:[#allocation1 + $0x8] sm:$0xff pattern:$0x73625140]
  %v842 = vld.sshfl [vmem:[#allocation1 + $0x10] sm:$0xff pattern:$0x73625140]
  %v843 = vld.sshfl [vmem:[#allocation1 + $0x18] sm:$0xff pattern:$0x73625140]
  %v848 = vmul.f32 %v98, %v840
  %v849 = vmul.f32 %v99, %v841
  %v850 = vmul.f32 %v100, %v842
  %v851 = vmul.f32 %v101, %v843
  %v852 = vtanh.pop %v848
  %v853 = vtanh.pop %v849
  %v854 = vtanh.pop %v850
  %v855 = vtanh.pop %v851
  %v856 = vmul.f32 %v98, %v852
  %v857 = vmul.f32 %v99, %v853
  %v858 = vmul.f32 %v100, %v854
  %v859 = vmul.f32 %v101, %v855
  %v860 = vadd.f32 %v856, %v102
  %v861 = vadd.f32 %v857, %v103
  %v862 = vadd.f32 %v858, %v104
  %v863 = vadd.f32 %v859, %v105
  %v864 = vmul.f32 %v861, %v739
  %v865 = vmul.f32 %v860, %v862
  %v866 = vadd.f32 %v864, %v865
  %v867 = vtanh.pop %v866
  %v868 = vmul.f32 %v863, %v867
  %s869 = scalar_lea.vmem %s2, 10
  %870 = vst [vmem:[%s869] sm:$0x3] %v868
  %s871 = scalar_lea.vmem %s0, 48
  %v872 = vld [vmem:[%s871] sm:$0xff]
  %873 = vmatpush.msra.mxu0 %v77
  %874 = vmatpush.msra.mxu0 %v73
  %875 = vmatpush.msra.mxu0 %v69
  %876 = vmatpush.msra.mxu0 %v65
  %877 = vmatpush.msra.mxu0 %v61
  %878 = vmatpush.msra.mxu0 %v57
  %879 = vmatpush.msra.mxu0 %v53
  %880 = vmatpush.msra.mxu0 %v49
  %881 = vmatpush.msra.mxu0 %v45
  %882 = vmatpush.msra.mxu0 %v41
  %883 = vmatpush.msra.mxu0 %v37
  %884 = vmatpush.msra.mxu0 %v33
  %885 = vmatpush.msra.mxu0 %v29
  %886 = vmatpush.msra.mxu0 %v25
  %887 = vmatpush.msra.mxu0 %v21
  %888 = vmatpush.msra.mxu0 %v17
  %889 = vmatmul.f32.gmra.mxu0 %v868
  %v890 = vpop.f32.mrf.mxu0
  %v891 = vadd.f32 0.0, %v890
  %892 = vdwg.mxu0
  %893 = vmatpush.msra.mxu0 %v78
  %894 = vmatpush.msra.mxu0 %v74
  %895 = vmatpush.msra.mxu0 %v70
  %896 = vmatpush.msra.mxu0 %v66
  %897 = vmatpush.msra.mxu0 %v62
  %898 = vmatpush.msra.mxu0 %v58
  %899 = vmatpush.msra.mxu0 %v54
  %900 = vmatpush.msra.mxu0 %v50
  %901 = vmatpush.msra.mxu0 %v46
  %902 = vmatpush.msra.mxu0 %v42
  %903 = vmatpush.msra.mxu0 %v38
  %904 = vmatpush.msra.mxu0 %v34
  %905 = vmatpush.msra.mxu0 %v30
  %906 = vmatpush.msra.mxu0 %v26
  %907 = vmatpush.msra.mxu0 %v22
  %908 = vmatpush.msra.mxu0 %v18
  %909 = vmatmul.f32.gmra.mxu0 %v868
  %v910 = vpop.f32.mrf.mxu0
  %v911 = vadd.f32 0.0, %v910
  %912 = vdwg.mxu0
  %913 = vmatpush.msra.mxu0 %v79
  %914 = vmatpush.msra.mxu0 %v75
  %915 = vmatpush.msra.mxu0 %v71
  %916 = vmatpush.msra.mxu0 %v67
  %917 = vmatpush.msra.mxu0 %v63
  %918 = vmatpush.msra.mxu0 %v59
  %919 = vmatpush.msra.mxu0 %v55
  %920 = vmatpush.msra.mxu0 %v51
  %921 = vmatpush.msra.mxu0 %v47
  %922 = vmatpush.msra.mxu0 %v43
  %923 = vmatpush.msra.mxu0 %v39
  %924 = vmatpush.msra.mxu0 %v35
  %925 = vmatpush.msra.mxu0 %v31
  %926 = vmatpush.msra.mxu0 %v27
  %927 = vmatpush.msra.mxu0 %v23
  %928 = vmatpush.msra.mxu0 %v19
  %929 = vmatmul.f32.gmra.mxu0 %v868
  %v930 = vpop.f32.mrf.mxu0
  %v931 = vadd.f32 0.0, %v930
  %932 = vdwg.mxu0
  %933 = vmatpush.msra.mxu0 %v80
  %934 = vmatpush.msra.mxu0 %v76
  %935 = vmatpush.msra.mxu0 %v72
  %936 = vmatpush.msra.mxu0 %v68
  %937 = vmatpush.msra.mxu0 %v64
  %938 = vmatpush.msra.mxu0 %v60
  %939 = vmatpush.msra.mxu0 %v56
  %940 = vmatpush.msra.mxu0 %v52
  %941 = vmatpush.msra.mxu0 %v48
  %942 = vmatpush.msra.mxu0 %v44
  %943 = vmatpush.msra.mxu0 %v40
  %944 = vmatpush.msra.mxu0 %v36
  %945 = vmatpush.msra.mxu0 %v32
  %946 = vmatpush.msra.mxu0 %v28
  %947 = vmatpush.msra.mxu0 %v24
  %948 = vmatpush.msra.mxu0 %v20
  %949 = vmatmul.f32.gmra.mxu0 %v868
  %v950 = vpop.f32.mrf.mxu0
  %v951 = vadd.f32 0.0, %v950
  %952 = vdwg.mxu0
  %v957 = vrot.slane %v911, 6
  %v958 = vrot.slane %v931, 4
  %v959 = vrot.slane %v951, 2
  %v960 = vsel %vm196, %v891, %v957
  %v961 = vsel %vm198, %v958, %v959
  %v962 = vsel %vm200, %v960, %v961
  %v964 = vadd.f32 %v872, %v962
  %966 = vst [vmem:[#allocation1] ss:$4 sm:$0xff] %v964
  %v967 = vld.sshfl [vmem:[#allocation1] sm:$0xff pattern:$0x73625140]
  %v968 = vld.sshfl [vmem:[#allocation1 + $0x8] sm:$0xff pattern:$0x73625140]
  %v969 = vld.sshfl [vmem:[#allocation1 + $0x10] sm:$0xff pattern:$0x73625140]
  %v970 = vld.sshfl [vmem:[#allocation1 + $0x18] sm:$0xff pattern:$0x73625140]
  %v975 = vmul.f32 %v98, %v967
  %v976 = vmul.f32 %v99, %v968
  %v977 = vmul.f32 %v100, %v969
  %v978 = vmul.f32 %v101, %v970
  %v979 = vtanh.pop %v975
  %v980 = vtanh.pop %v976
  %v981 = vtanh.pop %v977
  %v982 = vtanh.pop %v978
  %v983 = vmul.f32 %v98, %v979
  %v984 = vmul.f32 %v99, %v980
  %v985 = vmul.f32 %v100, %v981
  %v986 = vmul.f32 %v101, %v982
  %v987 = vadd.f32 %v983, %v102
  %v988 = vadd.f32 %v984, %v103
  %v989 = vadd.f32 %v985, %v104
  %v990 = vadd.f32 %v986, %v105
  %v991 = vmul.f32 %v988, %v866
  %v992 = vmul.f32 %v987, %v989
  %v993 = vadd.f32 %v991, %v992
  %v994 = vtanh.pop %v993
  %v995 = vmul.f32 %v990, %v994
  %s996 = scalar_lea.vmem %s2, 12
  %997 = vst [vmem:[%s996] sm:$0x3] %v995
  %s998 = scalar_lea.vmem %s0, 56
  %v999 = vld [vmem:[%s998] sm:$0xff]
  %1000 = vmatpush.msra.mxu0 %v77
  %1001 = vmatpush.msra.mxu0 %v73
  %1002 = vmatpush.msra.mxu0 %v69
  %1003 = vmatpush.msra.mxu0 %v65
  %1004 = vmatpush.msra.mxu0 %v61
  %1005 = vmatpush.msra.mxu0 %v57
  %1006 = vmatpush.msra.mxu0 %v53
  %1007 = vmatpush.msra.mxu0 %v49
  %1008 = vmatpush.msra.mxu0 %v45
  %1009 = vmatpush.msra.mxu0 %v41
  %1010 = vmatpush.msra.mxu0 %v37
  %1011 = vmatpush.msra.mxu0 %v33
  %1012 = vmatpush.msra.mxu0 %v29
  %1013 = vmatpush.msra.mxu0 %v25
  %1014 = vmatpush.msra.mxu0 %v21
  %1015 = vmatpush.msra.mxu0 %v17
  %1016 = vmatmul.f32.gmra.mxu0 %v995
  %v1017 = vpop.f32.mrf.mxu0
  %v1018 = vadd.f32 0.0, %v1017
  %1019 = vdwg.mxu0
  %1020 = vmatpush.msra.mxu0 %v78
  %1021 = vmatpush.msra.mxu0 %v74
  %1022 = vmatpush.msra.mxu0 %v70
  %1023 = vmatpush.msra.mxu0 %v66
  %1024 = vmatpush.msra.mxu0 %v62
  %1025 = vmatpush.msra.mxu0 %v58
  %1026 = vmatpush.msra.mxu0 %v54
  %1027 = vmatpush.msra.mxu0 %v50
  %1028 = vmatpush.msra.mxu0 %v46
  %1029 = vmatpush.msra.mxu0 %v42
  %1030 = vmatpush.msra.mxu0 %v38
  %1031 = vmatpush.msra.mxu0 %v34
  %1032 = vmatpush.msra.mxu0 %v30
  %1033 = vmatpush.msra.mxu0 %v26
  %1034 = vmatpush.msra.mxu0 %v22
  %1035 = vmatpush.msra.mxu0 %v18
  %1036 = vmatmul.f32.gmra.mxu0 %v995
  %v1037 = vpop.f32.mrf.mxu0
  %v1038 = vadd.f32 0.0, %v1037
  %1039 = vdwg.mxu0
  %1040 = vmatpush.msra.mxu0 %v79
  %1041 = vmatpush.msra.mxu0 %v75
  %1042 = vmatpush.msra.mxu0 %v71
  %1043 = vmatpush.msra.mxu0 %v67
  %1044 = vmatpush.msra.mxu0 %v63
  %1045 = vmatpush.msra.mxu0 %v59
  %1046 = vmatpush.msra.mxu0 %v55
  %1047 = vmatpush.msra.mxu0 %v51
  %1048 = vmatpush.msra.mxu0 %v47
  %1049 = vmatpush.msra.mxu0 %v43
  %1050 = vmatpush.msra.mxu0 %v39
  %1051 = vmatpush.msra.mxu0 %v35
  %1052 = vmatpush.msra.mxu0 %v31
  %1053 = vmatpush.msra.mxu0 %v27
  %1054 = vmatpush.msra.mxu0 %v23
  %1055 = vmatpush.msra.mxu0 %v19
  %1056 = vmatmul.f32.gmra.mxu0 %v995
  %v1057 = vpop.f32.mrf.mxu0
  %v1058 = vadd.f32 0.0, %v1057
  %1059 = vdwg.mxu0
  %1060 = vmatpush.msra.mxu0 %v80
  %1061 = vmatpush.msra.mxu0 %v76
  %1062 = vmatpush.msra.mxu0 %v72
  %1063 = vmatpush.msra.mxu0 %v68
  %1064 = vmatpush.msra.mxu0 %v64
  %1065 = vmatpush.msra.mxu0 %v60
  %1066 = vmatpush.msra.mxu0 %v56
  %1067 = vmatpush.msra.mxu0 %v52
  %1068 = vmatpush.msra.mxu0 %v48
  %1069 = vmatpush.msra.mxu0 %v44
  %1070 = vmatpush.msra.mxu0 %v40
  %1071 = vmatpush.msra.mxu0 %v36
  %1072 = vmatpush.msra.mxu0 %v32
  %1073 = vmatpush.msra.mxu0 %v28
  %1074 = vmatpush.msra.mxu0 %v24
  %1075 = vmatpush.msra.mxu0 %v20
  %1076 = vmatmul.f32.gmra.mxu0 %v995
  %v1077 = vpop.f32.mrf.mxu0
  %v1078 = vadd.f32 0.0, %v1077
  %1079 = vdwg.mxu0
  %v1084 = vrot.slane %v1038, 6
  %v1085 = vrot.slane %v1058, 4
  %v1086 = vrot.slane %v1078, 2
  %v1087 = vsel %vm196, %v1018, %v1084
  %v1088 = vsel %vm198, %v1085, %v1086
  %v1089 = vsel %vm200, %v1087, %v1088
  %v1091 = vadd.f32 %v999, %v1089
  %1093 = vst [vmem:[#allocation1] ss:$4 sm:$0xff] %v1091
  %v1094 = vld.sshfl [vmem:[#allocation1] sm:$0xff pattern:$0x73625140]
  %v1095 = vld.sshfl [vmem:[#allocation1 + $0x8] sm:$0xff pattern:$0x73625140]
  %v1096 = vld.sshfl [vmem:[#allocation1 + $0x10] sm:$0xff pattern:$0x73625140]
  %v1097 = vld.sshfl [vmem:[#allocation1 + $0x18] sm:$0xff pattern:$0x73625140]
  %v1102 = vmul.f32 %v98, %v1094
  %v1103 = vmul.f32 %v99, %v1095
  %v1104 = vmul.f32 %v100, %v1096
  %v1105 = vmul.f32 %v101, %v1097
  %v1106 = vtanh.pop %v1102
  %v1107 = vtanh.pop %v1103
  %v1108 = vtanh.pop %v1104
  %v1109 = vtanh.pop %v1105
  %v1110 = vmul.f32 %v98, %v1106
  %v1111 = vmul.f32 %v99, %v1107
  %v1112 = vmul.f32 %v100, %v1108
  %v1113 = vmul.f32 %v101, %v1109
  %v1114 = vadd.f32 %v1110, %v102
  %v1115 = vadd.f32 %v1111, %v103
  %v1116 = vadd.f32 %v1112, %v104
  %v1117 = vadd.f32 %v1113, %v105
  %v1118 = vmul.f32 %v1115, %v993
  %v1119 = vmul.f32 %v1114, %v1116
  %v1120 = vadd.f32 %v1118, %v1119
  %v1121 = vtanh.pop %v1120
  %v1122 = vmul.f32 %v1117, %v1121
  %s1123 = scalar_lea.vmem %s2, 14
  %1124 = vst [vmem:[%s1123] sm:$0x3] %v1122
  %1125 = vst [vmem:[#allocation2] sm:$0x3] %v1122
  %1126 = vst [vmem:[#allocation3] sm:$0x3] %v1120
  // Predicated region
  $region14: #{lstm_a_v_forward.1} parent=0 // pred_check
    _
  $region15: #{lstm_a_v_forward.1} parent=0 // pred_check_branch
    %1128 = sbr.rel (0) target = $region17
  $region16: #{lstm_a_v_forward.1} parent=0 // pred_region
    _
  $region17: #{lstm_a_v_forward.1} parent=0 // pred_fallthru
    _
  // Predicated region
  $region18: #{lstm_a_v_forward.1} parent=0 // pred_check
    _
  $region19: #{lstm_a_v_forward.1} parent=0 // pred_check_branch
    %1130 = sbr.rel (0) target = $region21
  $region20: #{lstm_a_v_forward.1} parent=0 // pred_region
    _
  $region21: #{lstm_a_v_forward.1} parent=0 // pred_fallthru
    _

</llo_original>
